<compile_context>
chip_gen: v7x
topology: tpu7x:2x2x1
jax: 0.10.0
libtpu: 0.0.40
codegen_flags: <defaults>
</compile_context>

<pallas_src>
import functools

import jax
import jax.numpy as jnp
from jax import lax
from jax.experimental import pallas as pl
from jax.experimental.pallas import tpu as pltpu

_LANES = 128
_MASK_VALUE = -1.0e30  # large negative bias for padded key columns


def _attention_kernel(x_ref, wqkv_ref, bqkv_ref, wproj_ref, bproj_ref, o_ref, ctx_ref,
                      *, num_heads, n_valid):
    """One grid step == one batch element.
    Fused: qkv matmul -> per-head (q k^T, softmax, @v) -> output projection.
    All matmuls run bf16 x bf16 with f32 accumulation on the MXU."""
    x = x_ref[0]                                   # (N_pad, E) bf16
    n_pad, e = x.shape
    hd = e // num_heads

    # ---- QKV projection (MXU), f32 bias add, single bf16 cast of the whole slab ----
    qkv_f32 = jnp.dot(x, wqkv_ref[...], preferred_element_type=jnp.float32)   # (N_pad, 3E)
    qkv = (qkv_f32 + bqkv_ref[...]).astype(jnp.bfloat16)                      # (N_pad, 3E) bf16
    # NOTE: softmax scale is already folded into the q columns of w_qkv / b_qkv.

    # ---- key-padding bias (static: n_valid / n_pad are trace-time constants) ----
    if n_pad > n_valid:
        key_ids = lax.broadcasted_iota(jnp.int32, (1, n_pad), 1)
        key_bias = jnp.where(key_ids < n_valid, 0.0, _MASK_VALUE).astype(jnp.float32)
    else:
        key_bias = None

    # ---- head grouping so ctx stores are lane-dense (128 lanes, or full width) ----
    if _LANES % hd == 0:
        hpg = min(num_heads, _LANES // hd)
        while num_heads % hpg:
            hpg -= 1
    else:
        hpg = 1
    group_w = hpg * hd
    num_groups = num_heads // hpg

    for g in range(num_groups):
        group_outs = []
        for j in range(hpg):
            h = g * hpg + j
            q = qkv[:, h * hd:(h + 1) * hd]                       # (N_pad, hd) bf16 (scaled)
            k = qkv[:, e + h * hd: e + (h + 1) * hd]              # (N_pad, hd) bf16
            v = qkv[:, 2 * e + h * hd: 2 * e + (h + 1) * hd]      # (N_pad, hd) bf16

            # q @ k^T without materializing a transpose: contract last dims of both.
            s = lax.dot_general(q, k, (((1,), (1,)), ((), ())),
                                preferred_element_type=jnp.float32)   # (N_pad, N_pad) f32
            if key_bias is not None:
                s = s + key_bias                                      # mask padded keys

            # numerically-stable softmax, normalization deferred to the PV output
            s = s - jnp.max(s, axis=-1, keepdims=True)
            p = jnp.exp(s)                                            # unnormalized, <= 1
            recip = pl.reciprocal(jnp.sum(p, axis=-1, keepdims=True), approx=True)

            head_out = jnp.dot(p.astype(jnp.bfloat16), v,
                               preferred_element_type=jnp.float32)    # (N_pad, hd) f32
            head_out = head_out * recip                               # (N_pad, hd) scale only
            group_outs.append(head_out.astype(jnp.bfloat16))

        # lane-dense store of the whole group (== torch's transpose(1,2).reshape layout)
        if hpg == 1:
            grp = group_outs[0]
        else:
            grp = jnp.concatenate(group_outs, axis=-1)                # (N_pad, group_w)
        ctx_ref[:, g * group_w:(g + 1) * group_w] = grp

    # ---- output projection: one E-wide MXU matmul over the contiguous ctx slab ----
    out = jnp.dot(ctx_ref[...], wproj_ref[...], preferred_element_type=jnp.float32)
    out = out + bproj_ref[...]
    o_ref[0] = out.astype(o_ref.dtype)


def attention_forward(x, w_qkv, b_qkv, w_proj, b_proj, *, num_heads, out_dtype=None):
    """x: (B, N, E).  w_qkv: (E, 3E), b_qkv: (3E,), w_proj: (E, E), b_proj: (E,).
    Returns (B, N, E) in out_dtype (default: x.dtype).  Compute is bf16 with f32 acc."""
    B, N, E = x.shape
    assert E % num_heads == 0, "embed_dim must be divisible by num_heads"
    out_dtype = x.dtype if out_dtype is None else out_dtype

    # NOTE: the module uses embed_dim**-0.5 (not head_dim**-0.5) -- reproduced exactly.
    scale = float(E) ** -0.5

    # Fold the softmax scale into the q block of the qkv projection (weights + bias).
    col_scale = jnp.concatenate([jnp.full((E,), scale, jnp.float32),
                                 jnp.ones((2 * E,), jnp.float32)])
    w_qkv_s = w_qkv.astype(jnp.float32) * col_scale[None, :]
    b_qkv_s = b_qkv.astype(jnp.float32) * col_scale

    # Pad the sequence length to a lane-tile multiple; padded keys masked in-kernel.
    N_pad = max(_LANES, ((N + _LANES - 1) // _LANES) * _LANES)
    x_p = x if N_pad == N else jnp.pad(x, ((0, 0), (0, N_pad - N), (0, 0)))

    x_bf = x_p.astype(jnp.bfloat16)
    w_qkv_bf = w_qkv_s.astype(jnp.bfloat16)
    w_proj_bf = w_proj.astype(jnp.bfloat16)
    b_qkv2 = b_qkv_s.reshape(1, 3 * E)
    b_proj2 = b_proj.reshape(1, E).astype(jnp.float32)

    # VMEM budget derived from the actual working set (+ headroom); stays < v7x 64 MiB.
    out_isz = jnp.dtype(out_dtype).itemsize
    est = (2 * N_pad * E * 2                                   # x block, double-buffered (bf16)
           + 2 * N_pad * E * out_isz                           # out block, double-buffered
           + 2 * (E * 3 * E * 2 + 3 * E * 4 + E * E * 2 + E * 4)  # resident weights/biases
           + N_pad * 3 * E * (4 + 2)                           # qkv f32 temp + bf16 slab
           + 2 * N_pad * N_pad * 4                             # score / prob temporaries
           + N_pad * E * 2                                     # ctx scratch (bf16)
           + N_pad * E * 4)                                    # projection f32 temp
    vmem_limit = int(min(max(est * 3 // 2 + (4 << 20), 24 << 20), 60 << 20))

    kernel = functools.partial(_attention_kernel, num_heads=num_heads, n_valid=N)

    out = pl.pallas_call(
        kernel,
        out_shape=jax.ShapeDtypeStruct((B, N_pad, E), out_dtype),
        grid_spec=pltpu.PrefetchScalarGridSpec(
            num_scalar_prefetch=0,
            grid=(B,),
            in_specs=[
                pl.BlockSpec((1, N_pad, E), lambda b: (b, 0, 0)),    # x: one batch element
                pl.BlockSpec((E, 3 * E), lambda b: (0, 0)),          # w_qkv (resident)
                pl.BlockSpec((1, 3 * E), lambda b: (0, 0)),          # b_qkv (scale folded)
                pl.BlockSpec((E, E), lambda b: (0, 0)),              # w_proj (resident)
                pl.BlockSpec((1, E), lambda b: (0, 0)),              # b_proj
            ],
            out_specs=pl.BlockSpec((1, N_pad, E), lambda b: (b, 0, 0)),
            scratch_shapes=[pltpu.VMEM((N_pad, E), jnp.bfloat16)],   # per-head ctx slab
        ),
        compiler_params=pltpu.CompilerParams(
            dimension_semantics=("parallel",),
            vmem_limit_bytes=vmem_limit,
        ),
    )(x_bf, w_qkv_bf, b_qkv2, w_proj_bf, b_proj2)

    if N_pad != N:
        out = out[:, :N, :]
    return out


def _reference(x, w_qkv, b_qkv, w_proj, b_proj, num_heads):
    """Pure-JAX f32 reference mirroring the PyTorch module exactly."""
    B, N, E = x.shape
    hd = E // num_heads
    scale = float(E) ** -0.5
    qkv = x @ w_qkv + b_qkv                                  # (B, N, 3E)
    qkv = qkv.reshape(B, N, 3, num_heads, hd)
    q, k, v = jnp.transpose(qkv, (2, 0, 3, 1, 4))            # each (B, H, N, hd)
    attn = jnp.einsum("bhqd,bhkd->bhqk", q, k) * scale
    attn = jax.nn.softmax(attn, axis=-1)
    ctx = jnp.einsum("bhqk,bhkd->bhqd", attn, v)             # (B, H, N, hd)
    ctx = jnp.transpose(ctx, (0, 2, 1, 3)).reshape(B, N, E)
    return ctx @ w_proj + b_proj


if __name__ == "__main__":
    # Small, deterministic configuration consistent with the module.
    B, N, E, H = 2, 8, 32, 4
    key = jax.random.PRNGKey(0)
    kx, k1, k2, k3, k4 = jax.random.split(key, 5)

    x = jax.random.normal(kx, (B, N, E), dtype=jnp.float32)
    # Deterministic "Linear" parameters in (in, out) layout.
    w_qkv = jax.random.normal(k1, (E, 3 * E), dtype=jnp.float32) * 0.05
    b_qkv = jax.random.normal(k2, (3 * E,), dtype=jnp.float32) * 0.05
    w_proj = jax.random.normal(k3, (E, E), dtype=jnp.float32) * 0.05
    b_proj = jax.random.normal(k4, (E,), dtype=jnp.float32) * 0.05

    out = attention_forward(x, w_qkv, b_qkv, w_proj, b_proj, num_heads=H)
    out = jax.block_until_ready(out)

    ref = _reference(x, w_qkv, b_qkv, w_proj, b_proj, H)
    assert out.shape == (B, N, E)
    # Tolerance accounts for deliberate bf16 MXU operands (f32 accumulation).
    assert jnp.allclose(out, ref, rtol=2e-2, atol=2e-2), "mismatch vs pure-JAX reference"

    print("KERNEL_OK")
</pallas_src>

<mosaic_0001>
module attributes {stable_mosaic.version = 11 : i64} {
  func.func @_attention_kernel(%arg0: i32, %arg1: memref<1x128x32xbf16, #tpu.memory_space<vmem>>, %arg2: memref<32x96xbf16, #tpu.memory_space<vmem>>, %arg3: memref<1x96xf32, #tpu.memory_space<vmem>>, %arg4: memref<32x32xbf16, #tpu.memory_space<vmem>>, %arg5: memref<1x32xf32, #tpu.memory_space<vmem>>, %arg6: memref<1x128x32xf32, #tpu.memory_space<vmem>>, %arg7: memref<128x32xbf16, #tpu.memory_space<vmem>>) attributes {dimension_semantics = [#tpu.dimension_semantics<parallel>], iteration_bounds = array<i64: 2>, scalar_prefetch = 0 : i64, scratch_operands = 1 : i64, tpu.core_type = #tpu.core_type<tc>, window_params = [{transform_indices = @transform_0, window_bounds = array<i64: 1, 128, 32>}, {pipeline_mode = #tpu.pipeline_mode<synchronous>, transform_indices = @transform_1, window_bounds = array<i64: 32, 96>}, {pipeline_mode = #tpu.pipeline_mode<synchronous>, transform_indices = @transform_2, window_bounds = array<i64: 1, 96>}, {pipeline_mode = #tpu.pipeline_mode<synchronous>, transform_indices = @transform_3, window_bounds = array<i64: 32, 32>}, {pipeline_mode = #tpu.pipeline_mode<synchronous>, transform_indices = @transform_4, window_bounds = array<i64: 1, 32>}, {transform_indices = @transform_5, window_bounds = array<i64: 1, 128, 32>}]} {
    %c0 = arith.constant 0 : index
    %c0_0 = arith.constant 0 : index
    %c0_1 = arith.constant 0 : index
    %0 = vector.load %arg1[%c0, %c0_0, %c0_1] : memref<1x128x32xbf16, #tpu.memory_space<vmem>>, vector<1x128x32xbf16>
    %1 = vector.shape_cast %0 : vector<1x128x32xbf16> to vector<128x32xbf16>
    %c0_2 = arith.constant 0 : index
    %c0_3 = arith.constant 0 : index
    %2 = vector.load %arg2[%c0_2, %c0_3] : memref<32x96xbf16, #tpu.memory_space<vmem>>, vector<32x96xbf16>
    %cst = arith.constant dense<0.000000e+00> : vector<128x96xf32>
    %3 = tpu.matmul %1, %2, %cst {dimension_numbers = #tpu.dot_dimension_numbers<[1], [0], [0], [1], [0, 0, 1, 1], [], []>} : vector<128x32xbf16>, vector<32x96xbf16>, vector<128x96xf32> -> vector<128x96xf32>
    %c0_4 = arith.constant 0 : index
    %c0_5 = arith.constant 0 : index
    %4 = vector.load %arg3[%c0_4, %c0_5] : memref<1x96xf32, #tpu.memory_space<vmem>>, vector<1x96xf32>
    %5 = vector.broadcast %4 : vector<1x96xf32> to vector<128x96xf32>
    %6 = arith.addf %3, %5 : vector<128x96xf32>
    %7 = arith.truncf %6 : vector<128x96xf32> to vector<128x96xbf16>
    %8 = tpu.iota {dimensions = array<i32: 1>} : vector<1x128xi32>
    %c8_i32 = arith.constant 8 : i32
    %9 = vector.broadcast %c8_i32 : i32 to vector<1x128xi32>
    %10 = arith.cmpi slt, %8, %9 : vector<1x128xi32>
    %cst_6 = arith.constant 0.000000e+00 : f32
    %cst_7 = arith.constant -1.000000e+30 : f32
    %11 = vector.broadcast %cst_6 : f32 to vector<1x128xf32>
    %12 = vector.broadcast %cst_7 : f32 to vector<1x128xf32>
    %13 = arith.select %10, %11, %12 : vector<1x128xi1>, vector<1x128xf32>
    %14 = vector.extract_strided_slice %7 {offsets = [0, 0], sizes = [128, 8], strides = [1, 1]} : vector<128x96xbf16> to vector<128x8xbf16>
    %15 = vector.extract_strided_slice %7 {offsets = [0, 32], sizes = [128, 8], strides = [1, 1]} : vector<128x96xbf16> to vector<128x8xbf16>
    %16 = vector.extract_strided_slice %7 {offsets = [0, 64], sizes = [128, 8], strides = [1, 1]} : vector<128x96xbf16> to vector<128x8xbf16>
    %cst_8 = arith.constant dense<0.000000e+00> : vector<128x128xf32>
    %17 = tpu.matmul %14, %15, %cst_8 {dimension_numbers = #tpu.dot_dimension_numbers<[1], [1], [0], [0], [0, 0, 1, 0], [], []>} : vector<128x8xbf16>, vector<128x8xbf16>, vector<128x128xf32> -> vector<128x128xf32>
    %18 = vector.broadcast %13 : vector<1x128xf32> to vector<128x128xf32>
    %19 = arith.addf %17, %18 : vector<128x128xf32>
    %cst_9 = arith.constant dense<0xFF800000> : vector<128xf32>
    %20 = vector.multi_reduction <maximumf>, %19, %cst_9 [1] : vector<128x128xf32> to vector<128xf32>
    %21 = vector.shape_cast %20 : vector<128xf32> to vector<128x1xf32>
    %22 = vector.broadcast %21 : vector<128x1xf32> to vector<128x128xf32>
    %23 = arith.subf %19, %22 : vector<128x128xf32>
    %24 = math.exp %23 : vector<128x128xf32>
    %cst_10 = arith.constant dense<0.000000e+00> : vector<128xf32>
    %25 = vector.multi_reduction <add>, %24, %cst_10 [1] : vector<128x128xf32> to vector<128xf32>
    %26 = vector.shape_cast %25 : vector<128xf32> to vector<128x1xf32>
    %27 = tpu.reciprocal %26 {approx = true} : vector<128x1xf32> -> vector<128x1xf32>
    %28 = arith.truncf %24 : vector<128x128xf32> to vector<128x128xbf16>
    %cst_11 = arith.constant dense<0.000000e+00> : vector<128x8xf32>
    %29 = tpu.matmul %28, %16, %cst_11 {dimension_numbers = #tpu.dot_dimension_numbers<[1], [0], [0], [1], [0, 0, 1, 1], [], []>} : vector<128x128xbf16>, vector<128x8xbf16>, vector<128x8xf32> -> vector<128x8xf32>
    %30 = vector.broadcast %27 : vector<128x1xf32> to vector<128x8xf32>
    %31 = arith.mulf %29, %30 : vector<128x8xf32>
    %32 = arith.truncf %31 : vector<128x8xf32> to vector<128x8xbf16>
    %33 = vector.extract_strided_slice %7 {offsets = [0, 8], sizes = [128, 8], strides = [1, 1]} : vector<128x96xbf16> to vector<128x8xbf16>
    %34 = vector.extract_strided_slice %7 {offsets = [0, 40], sizes = [128, 8], strides = [1, 1]} : vector<128x96xbf16> to vector<128x8xbf16>
    %35 = vector.extract_strided_slice %7 {offsets = [0, 72], sizes = [128, 8], strides = [1, 1]} : vector<128x96xbf16> to vector<128x8xbf16>
    %cst_12 = arith.constant dense<0.000000e+00> : vector<128x128xf32>
    %36 = tpu.matmul %33, %34, %cst_12 {dimension_numbers = #tpu.dot_dimension_numbers<[1], [1], [0], [0], [0, 0, 1, 0], [], []>} : vector<128x8xbf16>, vector<128x8xbf16>, vector<128x128xf32> -> vector<128x128xf32>
    %37 = vector.broadcast %13 : vector<1x128xf32> to vector<128x128xf32>
    %38 = arith.addf %36, %37 : vector<128x128xf32>
    %cst_13 = arith.constant dense<0xFF800000> : vector<128xf32>
    %39 = vector.multi_reduction <maximumf>, %38, %cst_13 [1] : vector<128x128xf32> to vector<128xf32>
    %40 = vector.shape_cast %39 : vector<128xf32> to vector<128x1xf32>
    %41 = vector.broadcast %40 : vector<128x1xf32> to vector<128x128xf32>
    %42 = arith.subf %38, %41 : vector<128x128xf32>
    %43 = math.exp %42 : vector<128x128xf32>
    %cst_14 = arith.constant dense<0.000000e+00> : vector<128xf32>
    %44 = vector.multi_reduction <add>, %43, %cst_14 [1] : vector<128x128xf32> to vector<128xf32>
    %45 = vector.shape_cast %44 : vector<128xf32> to vector<128x1xf32>
    %46 = tpu.reciprocal %45 {approx = true} : vector<128x1xf32> -> vector<128x1xf32>
    %47 = arith.truncf %43 : vector<128x128xf32> to vector<128x128xbf16>
    %cst_15 = arith.constant dense<0.000000e+00> : vector<128x8xf32>
    %48 = tpu.matmul %47, %35, %cst_15 {dimension_numbers = #tpu.dot_dimension_numbers<[1], [0], [0], [1], [0, 0, 1, 1], [], []>} : vector<128x128xbf16>, vector<128x8xbf16>, vector<128x8xf32> -> vector<128x8xf32>
    %49 = vector.broadcast %46 : vector<128x1xf32> to vector<128x8xf32>
    %50 = arith.mulf %48, %49 : vector<128x8xf32>
    %51 = arith.truncf %50 : vector<128x8xf32> to vector<128x8xbf16>
    %52 = vector.extract_strided_slice %7 {offsets = [0, 16], sizes = [128, 8], strides = [1, 1]} : vector<128x96xbf16> to vector<128x8xbf16>
    %53 = vector.extract_strided_slice %7 {offsets = [0, 48], sizes = [128, 8], strides = [1, 1]} : vector<128x96xbf16> to vector<128x8xbf16>
    %54 = vector.extract_strided_slice %7 {offsets = [0, 80], sizes = [128, 8], strides = [1, 1]} : vector<128x96xbf16> to vector<128x8xbf16>
    %cst_16 = arith.constant dense<0.000000e+00> : vector<128x128xf32>
    %55 = tpu.matmul %52, %53, %cst_16 {dimension_numbers = #tpu.dot_dimension_numbers<[1], [1], [0], [0], [0, 0, 1, 0], [], []>} : vector<128x8xbf16>, vector<128x8xbf16>, vector<128x128xf32> -> vector<128x128xf32>
    %56 = vector.broadcast %13 : vector<1x128xf32> to vector<128x128xf32>
    %57 = arith.addf %55, %56 : vector<128x128xf32>
    %cst_17 = arith.constant dense<0xFF800000> : vector<128xf32>
    %58 = vector.multi_reduction <maximumf>, %57, %cst_17 [1] : vector<128x128xf32> to vector<128xf32>
    %59 = vector.shape_cast %58 : vector<128xf32> to vector<128x1xf32>
    %60 = vector.broadcast %59 : vector<128x1xf32> to vector<128x128xf32>
    %61 = arith.subf %57, %60 : vector<128x128xf32>
    %62 = math.exp %61 : vector<128x128xf32>
    %cst_18 = arith.constant dense<0.000000e+00> : vector<128xf32>
    %63 = vector.multi_reduction <add>, %62, %cst_18 [1] : vector<128x128xf32> to vector<128xf32>
    %64 = vector.shape_cast %63 : vector<128xf32> to vector<128x1xf32>
    %65 = tpu.reciprocal %64 {approx = true} : vector<128x1xf32> -> vector<128x1xf32>
    %66 = arith.truncf %62 : vector<128x128xf32> to vector<128x128xbf16>
    %cst_19 = arith.constant dense<0.000000e+00> : vector<128x8xf32>
    %67 = tpu.matmul %66, %54, %cst_19 {dimension_numbers = #tpu.dot_dimension_numbers<[1], [0], [0], [1], [0, 0, 1, 1], [], []>} : vector<128x128xbf16>, vector<128x8xbf16>, vector<128x8xf32> -> vector<128x8xf32>
    %68 = vector.broadcast %65 : vector<128x1xf32> to vector<128x8xf32>
    %69 = arith.mulf %67, %68 : vector<128x8xf32>
    %70 = arith.truncf %69 : vector<128x8xf32> to vector<128x8xbf16>
    %71 = vector.extract_strided_slice %7 {offsets = [0, 24], sizes = [128, 8], strides = [1, 1]} : vector<128x96xbf16> to vector<128x8xbf16>
    %72 = vector.extract_strided_slice %7 {offsets = [0, 56], sizes = [128, 8], strides = [1, 1]} : vector<128x96xbf16> to vector<128x8xbf16>
    %73 = vector.extract_strided_slice %7 {offsets = [0, 88], sizes = [128, 8], strides = [1, 1]} : vector<128x96xbf16> to vector<128x8xbf16>
    %cst_20 = arith.constant dense<0.000000e+00> : vector<128x128xf32>
    %74 = tpu.matmul %71, %72, %cst_20 {dimension_numbers = #tpu.dot_dimension_numbers<[1], [1], [0], [0], [0, 0, 1, 0], [], []>} : vector<128x8xbf16>, vector<128x8xbf16>, vector<128x128xf32> -> vector<128x128xf32>
    %75 = vector.broadcast %13 : vector<1x128xf32> to vector<128x128xf32>
    %76 = arith.addf %74, %75 : vector<128x128xf32>
    %cst_21 = arith.constant dense<0xFF800000> : vector<128xf32>
    %77 = vector.multi_reduction <maximumf>, %76, %cst_21 [1] : vector<128x128xf32> to vector<128xf32>
    %78 = vector.shape_cast %77 : vector<128xf32> to vector<128x1xf32>
    %79 = vector.broadcast %78 : vector<128x1xf32> to vector<128x128xf32>
    %80 = arith.subf %76, %79 : vector<128x128xf32>
    %81 = math.exp %80 : vector<128x128xf32>
    %cst_22 = arith.constant dense<0.000000e+00> : vector<128xf32>
    %82 = vector.multi_reduction <add>, %81, %cst_22 [1] : vector<128x128xf32> to vector<128xf32>
    %83 = vector.shape_cast %82 : vector<128xf32> to vector<128x1xf32>
    %84 = tpu.reciprocal %83 {approx = true} : vector<128x1xf32> -> vector<128x1xf32>
    %85 = arith.truncf %81 : vector<128x128xf32> to vector<128x128xbf16>
    %cst_23 = arith.constant dense<0.000000e+00> : vector<128x8xf32>
    %86 = tpu.matmul %85, %73, %cst_23 {dimension_numbers = #tpu.dot_dimension_numbers<[1], [0], [0], [1], [0, 0, 1, 1], [], []>} : vector<128x128xbf16>, vector<128x8xbf16>, vector<128x8xf32> -> vector<128x8xf32>
    %87 = vector.broadcast %84 : vector<128x1xf32> to vector<128x8xf32>
    %88 = arith.mulf %86, %87 : vector<128x8xf32>
    %89 = arith.truncf %88 : vector<128x8xf32> to vector<128x8xbf16>
    %90 = tpu.concatenate %32, %51, %70, %89 in 1 : vector<128x8xbf16>, vector<128x8xbf16>, vector<128x8xbf16>, vector<128x8xbf16> -> vector<128x32xbf16>
    %c0_24 = arith.constant 0 : index
    %c0_25 = arith.constant 0 : index
    %91 = vector.load %arg7[%c0_24, %c0_25] : memref<128x32xbf16, #tpu.memory_space<vmem>>, vector<128x32xbf16>
    tpu.vector_store %arg7[%c0_24, %c0_25], %90 {strides = array<i32>} : memref<128x32xbf16, #tpu.memory_space<vmem>>, vector<128x32xbf16>,
    %c0_26 = arith.constant 0 : index
    %c0_27 = arith.constant 0 : index
    %92 = vector.load %arg7[%c0_26, %c0_27] : memref<128x32xbf16, #tpu.memory_space<vmem>>, vector<128x32xbf16>
    %c0_28 = arith.constant 0 : index
    %c0_29 = arith.constant 0 : index
    %93 = vector.load %arg4[%c0_28, %c0_29] : memref<32x32xbf16, #tpu.memory_space<vmem>>, vector<32x32xbf16>
    %cst_30 = arith.constant dense<0.000000e+00> : vector<128x32xf32>
    %94 = tpu.matmul %92, %93, %cst_30 {dimension_numbers = #tpu.dot_dimension_numbers<[1], [0], [0], [1], [0, 0, 1, 1], [], []>} : vector<128x32xbf16>, vector<32x32xbf16>, vector<128x32xf32> -> vector<128x32xf32>
    %c0_31 = arith.constant 0 : index
    %c0_32 = arith.constant 0 : index
    %95 = vector.load %arg5[%c0_31, %c0_32] : memref<1x32xf32, #tpu.memory_space<vmem>>, vector<1x32xf32>
    %96 = vector.broadcast %95 : vector<1x32xf32> to vector<128x32xf32>
    %97 = arith.addf %94, %96 : vector<128x32xf32>
    %c0_33 = arith.constant 0 : index
    %c0_34 = arith.constant 0 : index
    %c0_35 = arith.constant 0 : index
    %98 = vector.load %arg6[%c0_33, %c0_34, %c0_35] : memref<1x128x32xf32, #tpu.memory_space<vmem>>, vector<1x128x32xf32>
    %99 = vector.shape_cast %98 : vector<1x128x32xf32> to vector<128x32xf32>
    %100 = vector.shape_cast %97 : vector<128x32xf32> to vector<1x128x32xf32>
    tpu.vector_store %arg6[%c0_33, %c0_34, %c0_35], %100 {strides = array<i32>} : memref<1x128x32xf32, #tpu.memory_space<vmem>>, vector<1x128x32xf32>,
    return
  }
  func.func @transform_0(%arg0: i32) -> (i32, i32, i32) {
    %c0_i32 = arith.constant 0 : i32
    %c0_i32_0 = arith.constant 0 : i32
    %c0_i32_1 = arith.constant 0 : i32
    return %arg0, %c0_i32, %c0_i32_0 : i32, i32, i32
  }
  func.func @transform_1(%arg0: i32) -> (i32, i32) {
    %c0_i32 = arith.constant 0 : i32
    %c0_i32_0 = arith.constant 0 : i32
    %c0_i32_1 = arith.constant 0 : i32
    return %c0_i32, %c0_i32_0 : i32, i32
  }
  func.func @transform_2(%arg0: i32) -> (i32, i32) {
    %c0_i32 = arith.constant 0 : i32
    %c0_i32_0 = arith.constant 0 : i32
    %c0_i32_1 = arith.constant 0 : i32
    return %c0_i32, %c0_i32_0 : i32, i32
  }
  func.func @transform_3(%arg0: i32) -> (i32, i32) {
    %c0_i32 = arith.constant 0 : i32
    %c0_i32_0 = arith.constant 0 : i32
    %c0_i32_1 = arith.constant 0 : i32
    return %c0_i32, %c0_i32_0 : i32, i32
  }
  func.func @transform_4(%arg0: i32) -> (i32, i32) {
    %c0_i32 = arith.constant 0 : i32
    %c0_i32_0 = arith.constant 0 : i32
    %c0_i32_1 = arith.constant 0 : i32
    return %c0_i32, %c0_i32_0 : i32, i32
  }
  func.func @transform_5(%arg0: i32) -> (i32, i32, i32) {
    %c0_i32 = arith.constant 0 : i32
    %c0_i32_0 = arith.constant 0 : i32
    %c0_i32_1 = arith.constant 0 : i32
    return %arg0, %c0_i32, %c0_i32_0 : i32, i32, i32
  }
}

</mosaic_0001>

<llo_original>
// kernel: tpu_custom_call.1
$region0: #{tpu_custom_call.1}
  #allocation0 [shape = 'u32[]', space=smem, size = 0x4, offset = 0x4, fixed_abs, tag = 'smem constant byte address 0x4 - core index']
  #allocation1 [shape = 'u32[144,128]{1,0:T(1,128)}', space=vmem, size = 0x12000, scoped, tag = 'internal scratch']
  #allocation2 [shape = 'bf16[128,32]{1,0:T(16,128)(2,1)}', space=vmem, size = 0x8000, scoped, tag = 'scratch operand']
  %s0 = inlined_call_operand.vmem [shape: bf16[2,128,32], index: 0, kind: input, shape index: {}]
  %s1 = inlined_call_operand.vmem [shape: bf16[32,96], index: 1, kind: input, shape index: {}]
  %s2 = inlined_call_operand.vmem [shape: f32[1,96], index: 2, kind: input, shape index: {}]
  %s3 = inlined_call_operand.vmem [shape: bf16[32,32], index: 3, kind: input, shape index: {}]
  %s4 = inlined_call_operand.vmem [shape: f32[1,32], index: 4, kind: input, shape index: {}]
  %s5 = inlined_call_operand.vmem [shape: f32[2,128,32], index: 5, kind: output, shape index: {}]
  %s6 = sld [smem:[#allocation0]]
  $region53: #{tpu_custom_call.1} parent=0
    _
  %s8 = ssub.s32 1, %s6
  %s9 = scalar_select 0, %s8, %s6
  loop: start=0, step=1, limit=4
  $region2: #{tpu_custom_call.1} parent=0 // loop_pre_header
    _
  $region3: #{tpu_custom_call.1} parent=0 // loop_header
    %s11 = sphi 0, %s15
    %p12 = scmp.ge.s32.totalorder %s11, 4
    %s21 = sphi 0, %s23
    %s24 = sphi 0, %s21
    %s25 = sphi 0, %s24
    %s41 = sphi 0, %s25
    %s45 = sphi 0, %s45
    %s47 = sphi 0, %s45
    %s48 = sphi 0, %s47
    %s62 = sphi 0, %s48
    %s66 = sphi 0, %s66
    %s68 = sphi 0, %s66
    %s69 = sphi 0, %s68
    %s83 = sphi 0, %s69
    %s87 = sphi 0, %s87
    %s89 = sphi 0, %s87
    %s90 = sphi 0, %s89
    %s104 = sphi 0, %s90
    %s108 = sphi 0, %s108
    %s110 = sphi 0, %s108
    %s111 = sphi 0, %s110
    %s125 = sphi 0, %s111
    %s131 = sphi 0, %s133
    %s134 = sphi 0, %s131
    %s135 = sphi 0, %s134
    %s151 = sphi 0, %s135
  $region4: #{tpu_custom_call.1} parent=0 // loop_header_branch
    %14 = sbr.rel (%p12) target = $region8
  $region5: #{tpu_custom_call.1} parent=0 // loop_body
    %s16 = ssub.s32 %s11, 1
    %s17 = ssub.s32 %s11, 2
    %s18 = sadd.s32 %s11, 1
    %s19 = ssub.s32 %s11, %s18
    %p20 = scmp.eq.s32.totalorder %s19, 0
    %s22 = sadd.s32 %s21, 1
    %s23 = scalar_select %p20, %s21, %s22
    %p26 = pneg %p20
    %p27 = scmp.eq.s32.totalorder %s11, 1
    %p28 = por %p26, %p27
    %p29 = scmp.ne.s32.totalorder %s21, %s24
    %p30 = scmp.eq.s32.totalorder %s11, 0
    %p31 = por %p29, %p30
    %p32 = scmp.ne.s32.totalorder %s21, %s24
    %p33 = scmp.eq.s32.totalorder %s16, 1
    %p34 = por %p32, %p33
    %p35 = scmp.ne.s32.totalorder %s24, %s25
    %p36 = scmp.eq.s32.totalorder %s16, 0
    %p37 = por %p35, %p36
    %p38 = scmp.ne.s32.totalorder %s24, %s25
    %p39 = scmp.eq.s32.totalorder %s17, 1
    %p40 = por %p38, %p39
    %p42 = scmp.ne.s32.totalorder %s25, %s41
    %p43 = scmp.eq.s32.totalorder %s17, 0
    %p44 = por %p42, %p43
    %s46 = sadd.s32 %s45, 1
    %p49 = scmp.eq.s32.totalorder %s11, 1
    %p50 = scmp.ne.s32.totalorder %s45, %s47
    %p51 = scmp.eq.s32.totalorder %s11, 0
    %p52 = por %p50, %p51
    %p53 = scmp.ne.s32.totalorder %s45, %s47
    %p54 = scmp.eq.s32.totalorder %s16, 1
    %p55 = por %p53, %p54
    %p56 = scmp.ne.s32.totalorder %s47, %s48
    %p57 = scmp.eq.s32.totalorder %s16, 0
    %p58 = por %p56, %p57
    %p59 = scmp.ne.s32.totalorder %s47, %s48
    %p60 = scmp.eq.s32.totalorder %s17, 1
    %p61 = por %p59, %p60
    %p63 = scmp.ne.s32.totalorder %s48, %s62
    %p64 = scmp.eq.s32.totalorder %s17, 0
    %p65 = por %p63, %p64
    %s67 = sadd.s32 %s66, 1
    %p70 = scmp.eq.s32.totalorder %s11, 1
    %p71 = scmp.ne.s32.totalorder %s66, %s68
    %p72 = scmp.eq.s32.totalorder %s11, 0
    %p73 = por %p71, %p72
    %p74 = scmp.ne.s32.totalorder %s66, %s68
    %p75 = scmp.eq.s32.totalorder %s16, 1
    %p76 = por %p74, %p75
    %p77 = scmp.ne.s32.totalorder %s68, %s69
    %p78 = scmp.eq.s32.totalorder %s16, 0
    %p79 = por %p77, %p78
    %p80 = scmp.ne.s32.totalorder %s68, %s69
    %p81 = scmp.eq.s32.totalorder %s17, 1
    %p82 = por %p80, %p81
    %p84 = scmp.ne.s32.totalorder %s69, %s83
    %p85 = scmp.eq.s32.totalorder %s17, 0
    %p86 = por %p84, %p85
    %s88 = sadd.s32 %s87, 1
    %p91 = scmp.eq.s32.totalorder %s11, 1
    %p92 = scmp.ne.s32.totalorder %s87, %s89
    %p93 = scmp.eq.s32.totalorder %s11, 0
    %p94 = por %p92, %p93
    %p95 = scmp.ne.s32.totalorder %s87, %s89
    %p96 = scmp.eq.s32.totalorder %s16, 1
    %p97 = por %p95, %p96
    %p98 = scmp.ne.s32.totalorder %s89, %s90
    %p99 = scmp.eq.s32.totalorder %s16, 0
    %p100 = por %p98, %p99
    %p101 = scmp.ne.s32.totalorder %s89, %s90
    %p102 = scmp.eq.s32.totalorder %s17, 1
    %p103 = por %p101, %p102
    %p105 = scmp.ne.s32.totalorder %s90, %s104
    %p106 = scmp.eq.s32.totalorder %s17, 0
    %p107 = por %p105, %p106
    %s109 = sadd.s32 %s108, 1
    %p112 = scmp.eq.s32.totalorder %s11, 1
    %p113 = scmp.ne.s32.totalorder %s108, %s110
    %p114 = scmp.eq.s32.totalorder %s11, 0
    %p115 = por %p113, %p114
    %p116 = scmp.ne.s32.totalorder %s108, %s110
    %p117 = scmp.eq.s32.totalorder %s16, 1
    %p118 = por %p116, %p117
    %p119 = scmp.ne.s32.totalorder %s110, %s111
    %p120 = scmp.eq.s32.totalorder %s16, 0
    %p121 = por %p119, %p120
    %p122 = scmp.ne.s32.totalorder %s110, %s111
    %p123 = scmp.eq.s32.totalorder %s17, 1
    %p124 = por %p122, %p123
    %p126 = scmp.ne.s32.totalorder %s111, %s125
    %p127 = scmp.eq.s32.totalorder %s17, 0
    %p128 = por %p126, %p127
    %s129 = ssub.s32 %s11, %s18
    %p130 = scmp.eq.s32.totalorder %s129, 0
    %s132 = sadd.s32 %s131, 1
    %s133 = scalar_select %p130, %s131, %s132
    %p136 = pneg %p130
    %p137 = scmp.eq.s32.totalorder %s11, 1
    %p138 = por %p136, %p137
    %p139 = scmp.ne.s32.totalorder %s131, %s134
    %p140 = scmp.eq.s32.totalorder %s11, 0
    %p141 = por %p139, %p140
    %p142 = scmp.ne.s32.totalorder %s131, %s134
    %p143 = scmp.eq.s32.totalorder %s16, 1
    %p144 = por %p142, %p143
    %p145 = scmp.ne.s32.totalorder %s134, %s135
    %p146 = scmp.eq.s32.totalorder %s16, 0
    %p147 = por %p145, %p146
    %p148 = scmp.ne.s32.totalorder %s134, %s135
    %p149 = scmp.eq.s32.totalorder %s17, 1
    %p150 = por %p148, %p149
    %p152 = scmp.ne.s32.totalorder %s135, %s151
    %p153 = scmp.eq.s32.totalorder %s17, 0
    %p154 = por %p152, %p153
    %p155 = scmp.le.s32.totalorder 1, %s11
    %p156 = scmp.lt.s32.totalorder %s11, 3
    %p157 = pnand %p155, %p156
    %p158 = pneg %p157
    // Predicated region
    $region9: #{tpu_custom_call.1} parent=5 // pred_check
      _
    $region10: #{tpu_custom_call.1} parent=5 // pred_check_branch
      %160 = sbr.rel (%p157) target = $region12
    $region11: #{tpu_custom_call.1} parent=5 // pred_region
      %s161 = ssub.s32 %s11, 1
      // Predicated region
      $region13: #{tpu_custom_call.1} parent=11 // pred_check
        %p162 = pneg %p58
      $region14: #{tpu_custom_call.1} parent=11 // pred_check_branch
        %164 = sbr.rel (%p162) target = $region16
      $region15: #{tpu_custom_call.1} parent=11 // pred_region
        _
      $region16: #{tpu_custom_call.1} parent=11 // pred_fallthru
        _
      // Predicated region
      $region17: #{tpu_custom_call.1} parent=11 // pred_check
        %p165 = pneg %p79
      $region18: #{tpu_custom_call.1} parent=11 // pred_check_branch
        %167 = sbr.rel (%p165) target = $region20
      $region19: #{tpu_custom_call.1} parent=11 // pred_region
        _
      $region20: #{tpu_custom_call.1} parent=11 // pred_fallthru
        _
      // Predicated region
      $region21: #{tpu_custom_call.1} parent=11 // pred_check
        %p168 = pneg %p100
      $region22: #{tpu_custom_call.1} parent=11 // pred_check_branch
        %170 = sbr.rel (%p168) target = $region24
      $region23: #{tpu_custom_call.1} parent=11 // pred_region
        _
      $region24: #{tpu_custom_call.1} parent=11 // pred_fallthru
        _
      // Predicated region
      $region25: #{tpu_custom_call.1} parent=11 // pred_check
        %p171 = pneg %p121
      $region26: #{tpu_custom_call.1} parent=11 // pred_check_branch
        %173 = sbr.rel (%p171) target = $region28
      $region27: #{tpu_custom_call.1} parent=11 // pred_region
        _
      $region28: #{tpu_custom_call.1} parent=11 // pred_fallthru
        _
    $region12: #{tpu_custom_call.1} parent=5 // pred_fallthru
      _
    %p174 = scmp.lt.s32.totalorder %s11, 2
    // Predicated region
    $region29: #{tpu_custom_call.1} parent=5 // pred_check
      %p175 = pneg %p174
    $region30: #{tpu_custom_call.1} parent=5 // pred_check_branch
      %177 = sbr.rel (%p175) target = $region32
    $region31: #{tpu_custom_call.1} parent=5 // pred_region
      // Predicated region
      $region33: #{tpu_custom_call.1} parent=31 // pred_check
        %p178 = pneg %p31
      $region34: #{tpu_custom_call.1} parent=31 // pred_check_branch
        %180 = sbr.rel (%p178) target = $region36
      $region35: #{tpu_custom_call.1} parent=31 // pred_region
        %p181 = scmp.lt.s32.totalorder %s11, 1
        %s182 = scalar_select %p181, %s11, 1
        %s183 = smul.addr %s182, 16
        %s184 = smul.addr %s183, 4
        %s185 = scalar_lea.vmem %s0, %s184
      $region36: #{tpu_custom_call.1} parent=31 // pred_fallthru
        _
    $region32: #{tpu_custom_call.1} parent=5 // pred_fallthru
      _
    %p186 = scmp.le.s32.totalorder 1, %s11
    %p187 = scmp.lt.s32.totalorder %s11, 3
    %p188 = pnand %p186, %p187
    %p189 = pneg %p188
    // Predicated region
    $region37: #{tpu_custom_call.1} parent=5 // pred_check
      _
    $region38: #{tpu_custom_call.1} parent=5 // pred_check_branch
      %191 = sbr.rel (%p188) target = $region40
    $region39: #{tpu_custom_call.1} parent=5 // pred_region
      %s192 = ssub.s32 %s11, 1
      %p193 = scmp.lt.s32.totalorder %s16, 1
      %s194 = scalar_select %p193, %s16, 1
      %s195 = smul.addr %s194, 16
      %s196 = smul.addr %s195, 4
      %s197 = scalar_lea.vmem %s0, %s196
      %p198 = pneg %p37
      %p199 = pneg %p34
      %p200 = pneg %p58
      %p201 = pneg %p55
      %p202 = pneg %p79
      %p203 = pneg %p76
      %p204 = pneg %p100
      %p205 = pneg %p97
      %p206 = pneg %p121
      %p207 = pneg %p118
      %p208 = pneg %p147
      %p209 = pneg %p144
      %p210 = scmp.lt.s32.totalorder %s16, 1
      %s211 = scalar_select %p210, %s16, 1
      %s212 = smul.addr %s211, 16
      %s213 = smul.addr %s212, 8
      %s214 = scalar_lea.vmem %s5, %s213
      %p215 = scmp.lt.s32.totalorder %s16, 1
      %s216 = scalar_select %p215, %s16, 1
      %s217 = smul.addr %s216, 16
      %s218 = smul.addr %s217, 4
      %s219 = scalar_lea.vmem %s0, %s218
      %p220 = scmp.lt.s32.totalorder %s16, 1
      %s221 = scalar_select %p220, %s16, 1
      %s222 = smul.addr %s221, 16
      %s223 = smul.addr %s222, 8
      %s224 = scalar_lea.vmem %s5, %s223
      %v226 = vld [vmem:[%s219] sm:$0xf]
      %v227 = vld [vmem:[%s219 + $0x4] sm:$0xf]
      %v228 = vld [vmem:[%s219 + $0x8] sm:$0xf]
      %v229 = vld [vmem:[%s219 + $0xc] sm:$0xf]
      %v230 = vld [vmem:[%s219 + $0x10] sm:$0xf]
      %v231 = vld [vmem:[%s219 + $0x14] sm:$0xf]
      %v232 = vld [vmem:[%s219 + $0x18] sm:$0xf]
      %v233 = vld [vmem:[%s219 + $0x1c] sm:$0xf]
      %v234 = vld [vmem:[%s219 + $0x20] sm:$0xf]
      %v235 = vld [vmem:[%s219 + $0x24] sm:$0xf]
      %v236 = vld [vmem:[%s219 + $0x28] sm:$0xf]
      %v237 = vld [vmem:[%s219 + $0x2c] sm:$0xf]
      %v238 = vld [vmem:[%s219 + $0x30] sm:$0xf]
      %v239 = vld [vmem:[%s219 + $0x34] sm:$0xf]
      %v240 = vld [vmem:[%s219 + $0x38] sm:$0xf]
      %v241 = vld [vmem:[%s219 + $0x3c] sm:$0xf]
      %v242 = vld [vmem:[%s1] sm:$0xf]
      %v243 = vld [vmem:[%s1 + $0x4] sm:$0xf]
      %v244 = vld [vmem:[%s1 + $0x8] sm:$0xf]
      %v245 = vld [vmem:[%s1 + $0xc] sm:$0xf]
      %v246 = vld [vmem:[%s2] sm:$0x1]
      %v248 = vlaneseq
      %v249 = vshrl.u32 %v248, 7
      %v250 = vsub.s32 0, %v249
      %v251 = vrot.slane %v246, %v250
      %v269 = vunpack.c.l.b16 %v226
      %v270 = vunpack.c.l.b16 %v227
      %v271 = vunpack.c.l.b16 %v228
      %v272 = vunpack.c.l.b16 %v229
      %v273 = vunpack.c.l.b16 %v230
      %v274 = vunpack.c.l.b16 %v231
      %v275 = vunpack.c.l.b16 %v232
      %v276 = vunpack.c.l.b16 %v233
      %v277 = vunpack.c.l.b16 %v234
      %v278 = vunpack.c.l.b16 %v235
      %v279 = vunpack.c.l.b16 %v236
      %v280 = vunpack.c.l.b16 %v237
      %v281 = vunpack.c.l.b16 %v238
      %v282 = vunpack.c.l.b16 %v239
      %v283 = vunpack.c.l.b16 %v240
      %v284 = vunpack.c.l.b16 %v241
      %v285 = vpack.c.b16 %v270, %v269
      %v286 = vpack.c.b16 %v272, %v271
      %v287 = vpack.c.b16 %v274, %v273
      %v288 = vpack.c.b16 %v276, %v275
      %v289 = vpack.c.b16 %v278, %v277
      %v290 = vpack.c.b16 %v280, %v279
      %v291 = vpack.c.b16 %v282, %v281
      %v292 = vpack.c.b16 %v284, %v283
      %v297 = vunpack.c.l.b16 %v242
      %v298 = vunpack.c.l.b16 %v243
      %v299 = vunpack.c.l.b16 %v244
      %v300 = vunpack.c.l.b16 %v245
      %v301 = vpack.c.b16 %v298, %v297
      %v302 = vpack.c.b16 %v300, %v299
      %vm305 = vcmask 261120
      %v307 = vsel %vm305, %v285, 0
      %v310 = vsel %vm305, %v286, 0
      %v313 = vsel %vm305, %v287, 0
      %v316 = vsel %vm305, %v288, 0
      %v319 = vsel %vm305, %v289, 0
      %v322 = vsel %vm305, %v290, 0
      %v325 = vsel %vm305, %v291, 0
      %v328 = vsel %vm305, %v292, 0
      %330 = vmatprep.subr.bf16.mxu0 0
      %331 = vmatpush1.bf16.msra.mxu0 %v301
      %332 = vmatprep.subr.bf16.mxu0 0
      %333 = vmatpush1.bf16.msra.mxu0 %v302
      %334 = vmatprep.subr.bf16.mxu0 0
      %335 = vmatpush1.bf16.msra.mxu0 0
      %336 = vmatprep.subr.bf16.mxu0 0
      %337 = vmatpush1.bf16.msra.mxu0 0
      %338 = vmatprep.subr.bf16.mxu0 0
      %339 = vmatpush1.bf16.msra.mxu0 0
      %340 = vmatprep.subr.bf16.mxu0 0
      %341 = vmatpush1.bf16.msra.mxu0 0
      %342 = vmatprep.subr.bf16.mxu0 0
      %343 = vmatpush1.bf16.msra.mxu0 0
      %344 = vmatprep.subr.bf16.mxu0 0
      %345 = vmatpush1.bf16.msra.mxu0 0
      %346 = vmatprep.subr.bf16.mxu0 0
      %347 = vmatpush1.bf16.msra.mxu0 0
      %348 = vmatprep.subr.bf16.mxu0 0
      %349 = vmatpush1.bf16.msra.mxu0 0
      %350 = vmatprep.subr.bf16.mxu0 0
      %351 = vmatpush1.bf16.msra.mxu0 0
      %352 = vmatprep.subr.bf16.mxu0 0
      %353 = vmatpush1.bf16.msra.mxu0 0
      %354 = vmatprep.subr.bf16.mxu0 0
      %355 = vmatpush1.bf16.msra.mxu0 0
      %356 = vmatprep.subr.bf16.mxu0 0
      %357 = vmatpush1.bf16.msra.mxu0 0
      %358 = vmatprep.subr.bf16.mxu0 0
      %359 = vmatpush1.bf16.msra.mxu0 0
      %360 = vmatprep.subr.bf16.mxu0 0
      %361 = vmatpush1.bf16.msra.mxu0 0
      %362 = vmatprep.mubr.bf16.mxu0 0
      %363 = vmatmul.mubr.bf16.gmra.mrb[0].mxu0 %v307
      %v364 = vpop.f32.mrb[0].mxu0
      %v365 = vadd.f32 %v251, %v364
      %v366 = vpop.f32.mrb[0].mxu0
      %v367 = vpop.f32.mrb[0].mxu0
      %v368 = vadd.f32 %v251, %v367
      %v369 = vpop.f32.mrb[0].mxu0
      %370 = vmatprep.mubr.bf16.mxu0 0
      %371 = vmatmul.mubr.bf16.gmra.mrb[0].mxu0 %v310
      %v372 = vpop.f32.mrb[0].mxu0
      %v373 = vadd.f32 %v251, %v372
      %v374 = vpop.f32.mrb[0].mxu0
      %v375 = vpop.f32.mrb[0].mxu0
      %v376 = vadd.f32 %v251, %v375
      %v377 = vpop.f32.mrb[0].mxu0
      %378 = vmatprep.mubr.bf16.mxu0 0
      %379 = vmatmul.mubr.bf16.gmra.mrb[0].mxu0 %v313
      %v380 = vpop.f32.mrb[0].mxu0
      %v381 = vadd.f32 %v251, %v380
      %v382 = vpop.f32.mrb[0].mxu0
      %v383 = vpop.f32.mrb[0].mxu0
      %v384 = vadd.f32 %v251, %v383
      %v385 = vpop.f32.mrb[0].mxu0
      %386 = vmatprep.mubr.bf16.mxu0 0
      %387 = vmatmul.mubr.bf16.gmra.mrb[0].mxu0 %v316
      %v388 = vpop.f32.mrb[0].mxu0
      %v389 = vadd.f32 %v251, %v388
      %v390 = vpop.f32.mrb[0].mxu0
      %v391 = vpop.f32.mrb[0].mxu0
      %v392 = vadd.f32 %v251, %v391
      %v393 = vpop.f32.mrb[0].mxu0
      %394 = vmatprep.mubr.bf16.mxu0 0
      %395 = vmatmul.mubr.bf16.gmra.mrb[0].mxu0 %v319
      %v396 = vpop.f32.mrb[0].mxu0
      %v397 = vadd.f32 %v251, %v396
      %v398 = vpop.f32.mrb[0].mxu0
      %v399 = vpop.f32.mrb[0].mxu0
      %v400 = vadd.f32 %v251, %v399
      %v401 = vpop.f32.mrb[0].mxu0
      %402 = vmatprep.mubr.bf16.mxu0 0
      %403 = vmatmul.mubr.bf16.gmra.mrb[0].mxu0 %v322
      %v404 = vpop.f32.mrb[0].mxu0
      %v405 = vadd.f32 %v251, %v404
      %v406 = vpop.f32.mrb[0].mxu0
      %v407 = vpop.f32.mrb[0].mxu0
      %v408 = vadd.f32 %v251, %v407
      %v409 = vpop.f32.mrb[0].mxu0
      %410 = vmatprep.mubr.bf16.mxu0 0
      %411 = vmatmul.mubr.bf16.gmra.mrb[0].mxu0 %v325
      %v412 = vpop.f32.mrb[0].mxu0
      %v413 = vadd.f32 %v251, %v412
      %v414 = vpop.f32.mrb[0].mxu0
      %v415 = vpop.f32.mrb[0].mxu0
      %v416 = vadd.f32 %v251, %v415
      %v417 = vpop.f32.mrb[0].mxu0
      %418 = vmatprep.mubr.bf16.mxu0 0
      %419 = vmatmul.mubr.bf16.gmra.mrb[0].mxu0 %v328
      %v420 = vpop.f32.mrb[0].mxu0
      %v421 = vadd.f32 %v251, %v420
      %v422 = vpop.f32.mrb[0].mxu0
      %v423 = vpop.f32.mrb[0].mxu0
      %v424 = vadd.f32 %v251, %v423
      %v425 = vpop.f32.mrb[0].mxu0
      %426 = vdwg.mxu0
      %v427 = vpack.c.bf16 %v368, %v365
      %v428 = vpack.c.bf16 %v376, %v373
      %v429 = vpack.c.bf16 %v384, %v381
      %v430 = vpack.c.bf16 %v392, %v389
      %v431 = vpack.c.bf16 %v400, %v397
      %v432 = vpack.c.bf16 %v408, %v405
      %v433 = vpack.c.bf16 %v416, %v413
      %v434 = vpack.c.bf16 %v424, %v421
      %v435 = vlaneseq
      %v436 = vand.u32 %v435, 127
      %vm437 = vcmp.lt.s32.totalorder %v436, 8
      %v438 = vsel %vm437, 0.0, -1e+30
      %447 = vrot.lane.b32.xlu0 %v427, 96
      %v448 = vpop.permute.xlu0 %447
      %449 = vrot.lane.b32.xlu0 %v428, 96
      %v450 = vpop.permute.xlu0 %449
      %451 = vrot.lane.b32.xlu0 %v429, 96
      %v452 = vpop.permute.xlu0 %451
      %453 = vrot.lane.b32.xlu0 %v430, 96
      %v454 = vpop.permute.xlu0 %453
      %455 = vrot.lane.b32.xlu0 %v431, 96
      %v456 = vpop.permute.xlu0 %455
      %457 = vrot.lane.b32.xlu0 %v432, 96
      %v458 = vpop.permute.xlu0 %457
      %459 = vrot.lane.b32.xlu0 %v433, 96
      %v460 = vpop.permute.xlu0 %459
      %461 = vrot.lane.b32.xlu0 %v434, 96
      %v462 = vpop.permute.xlu0 %461
      %vm463 = vcmask 64512
      %v465 = vsel %vm463, %v427, 0
      %v468 = vsel %vm463, %v428, 0
      %v471 = vsel %vm463, %v429, 0
      %v474 = vsel %vm463, %v430, 0
      %v477 = vsel %vm463, %v431, 0
      %v480 = vsel %vm463, %v432, 0
      %v483 = vsel %vm463, %v433, 0
      %v486 = vsel %vm463, %v434, 0
      %v489 = vsel %vm463, %v448, 0
      %v492 = vsel %vm463, %v450, 0
      %v495 = vsel %vm463, %v452, 0
      %v498 = vsel %vm463, %v454, 0
      %v501 = vsel %vm463, %v456, 0
      %v504 = vsel %vm463, %v458, 0
      %v507 = vsel %vm463, %v460, 0
      %v510 = vsel %vm463, %v462, 0
      %512 = vmatprep.subr.bf16.mxu0 0
      %513 = vmatpush1.bf16.xpose.msra.mxu0 %v489
      %514 = vmatprep.subr.bf16.mxu0 0
      %515 = vmatpush1.bf16.xpose.msra.mxu0 %v492
      %516 = vmatprep.subr.bf16.mxu0 0
      %517 = vmatpush1.bf16.xpose.msra.mxu0 %v495
      %518 = vmatprep.subr.bf16.mxu0 0
      %519 = vmatpush1.bf16.xpose.msra.mxu0 %v498
      %520 = vmatprep.subr.bf16.mxu0 0
      %521 = vmatpush1.bf16.xpose.msra.mxu0 %v501
      %522 = vmatprep.subr.bf16.mxu0 0
      %523 = vmatpush1.bf16.xpose.msra.mxu0 %v504
      %524 = vmatprep.subr.bf16.mxu0 0
      %525 = vmatpush1.bf16.xpose.msra.mxu0 %v507
      %526 = vmatprep.subr.bf16.mxu0 0
      %527 = vmatpush1.bf16.xpose.msra.mxu0 %v510
      %528 = vmatprep.subr.bf16.mxu0 0
      %529 = vmatpush1.bf16.xpose.msra.mxu0 0
      %530 = vmatprep.subr.bf16.mxu0 0
      %531 = vmatpush1.bf16.xpose.msra.mxu0 0
      %532 = vmatprep.subr.bf16.mxu0 0
      %533 = vmatpush1.bf16.xpose.msra.mxu0 0
      %534 = vmatprep.subr.bf16.mxu0 0
      %535 = vmatpush1.bf16.xpose.msra.mxu0 0
      %536 = vmatprep.subr.bf16.mxu0 0
      %537 = vmatpush1.bf16.xpose.msra.mxu0 0
      %538 = vmatprep.subr.bf16.mxu0 0
      %539 = vmatpush1.bf16.xpose.msra.mxu0 0
      %540 = vmatprep.subr.bf16.mxu0 0
      %541 = vmatpush1.bf16.xpose.msra.mxu0 0
      %542 = vmatprep.subr.bf16.mxu0 0
      %543 = vmatpush1.bf16.xpose.msra.mxu0 0
      %544 = vmatprep.mubr.bf16.mxu0 0
      %545 = vmatmul.mubr.bf16.gmra.mrb[0].mxu0 %v465
      %v546 = vpop.f32.mrb[0].mxu0
      %v547 = vadd.f32 %v438, %v546
      %v548 = vpop.f32.mrb[0].mxu0
      %v549 = vpop.f32.mrb[0].mxu0
      %v550 = vadd.f32 %v438, %v549
      %v551 = vpop.f32.mrb[0].mxu0
      %552 = vmatprep.mubr.bf16.mxu0 0
      %553 = vmatmul.mubr.bf16.gmra.mrb[0].mxu0 %v468
      %v554 = vpop.f32.mrb[0].mxu0
      %v555 = vadd.f32 %v438, %v554
      %v556 = vpop.f32.mrb[0].mxu0
      %v557 = vpop.f32.mrb[0].mxu0
      %v558 = vadd.f32 %v438, %v557
      %v559 = vpop.f32.mrb[0].mxu0
      %560 = vmatprep.mubr.bf16.mxu0 0
      %561 = vmatmul.mubr.bf16.gmra.mrb[0].mxu0 %v471
      %v562 = vpop.f32.mrb[0].mxu0
      %v563 = vadd.f32 %v438, %v562
      %v564 = vpop.f32.mrb[0].mxu0
      %v565 = vpop.f32.mrb[0].mxu0
      %v566 = vadd.f32 %v438, %v565
      %v567 = vpop.f32.mrb[0].mxu0
      %568 = vmatprep.mubr.bf16.mxu0 0
      %569 = vmatmul.mubr.bf16.gmra.mrb[0].mxu0 %v474
      %v570 = vpop.f32.mrb[0].mxu0
      %v571 = vadd.f32 %v438, %v570
      %v572 = vpop.f32.mrb[0].mxu0
      %v573 = vpop.f32.mrb[0].mxu0
      %v574 = vadd.f32 %v438, %v573
      %v575 = vpop.f32.mrb[0].mxu0
      %576 = vmatprep.mubr.bf16.mxu0 0
      %577 = vmatmul.mubr.bf16.gmra.mrb[0].mxu0 %v477
      %v578 = vpop.f32.mrb[0].mxu0
      %v579 = vadd.f32 %v438, %v578
      %v580 = vpop.f32.mrb[0].mxu0
      %v581 = vpop.f32.mrb[0].mxu0
      %v582 = vadd.f32 %v438, %v581
      %v583 = vpop.f32.mrb[0].mxu0
      %584 = vmatprep.mubr.bf16.mxu0 0
      %585 = vmatmul.mubr.bf16.gmra.mrb[0].mxu0 %v480
      %v586 = vpop.f32.mrb[0].mxu0
      %v587 = vadd.f32 %v438, %v586
      %v588 = vpop.f32.mrb[0].mxu0
      %v589 = vpop.f32.mrb[0].mxu0
      %v590 = vadd.f32 %v438, %v589
      %v591 = vpop.f32.mrb[0].mxu0
      %592 = vmatprep.mubr.bf16.mxu0 0
      %593 = vmatmul.mubr.bf16.gmra.mrb[0].mxu0 %v483
      %v594 = vpop.f32.mrb[0].mxu0
      %v595 = vadd.f32 %v438, %v594
      %v596 = vpop.f32.mrb[0].mxu0
      %v597 = vpop.f32.mrb[0].mxu0
      %v598 = vadd.f32 %v438, %v597
      %v599 = vpop.f32.mrb[0].mxu0
      %600 = vmatprep.mubr.bf16.mxu0 0
      %601 = vmatmul.mubr.bf16.gmra.mrb[0].mxu0 %v486
      %v602 = vpop.f32.mrb[0].mxu0
      %v603 = vadd.f32 %v438, %v602
      %v604 = vpop.f32.mrb[0].mxu0
      %v605 = vpop.f32.mrb[0].mxu0
      %v606 = vadd.f32 %v438, %v605
      %v607 = vpop.f32.mrb[0].mxu0
      %608 = vdwg.mxu0
      %609 = vmax.xlane.f32.xlu0 %v547
      %v610 = vpop.xlane.xlu0 %609
      %611 = vmax.xlane.f32.xlu0 %v550
      %v612 = vpop.xlane.xlu0 %611
      %613 = vmax.xlane.f32.xlu0 %v555
      %v614 = vpop.xlane.xlu0 %613
      %615 = vmax.xlane.f32.xlu0 %v558
      %v616 = vpop.xlane.xlu0 %615
      %617 = vmax.xlane.f32.xlu0 %v563
      %v618 = vpop.xlane.xlu0 %617
      %619 = vmax.xlane.f32.xlu0 %v566
      %v620 = vpop.xlane.xlu0 %619
      %621 = vmax.xlane.f32.xlu0 %v571
      %v622 = vpop.xlane.xlu0 %621
      %623 = vmax.xlane.f32.xlu0 %v574
      %v624 = vpop.xlane.xlu0 %623
      %625 = vmax.xlane.f32.xlu0 %v579
      %v626 = vpop.xlane.xlu0 %625
      %627 = vmax.xlane.f32.xlu0 %v582
      %v628 = vpop.xlane.xlu0 %627
      %629 = vmax.xlane.f32.xlu0 %v587
      %v630 = vpop.xlane.xlu0 %629
      %631 = vmax.xlane.f32.xlu0 %v590
      %v632 = vpop.xlane.xlu0 %631
      %633 = vmax.xlane.f32.xlu0 %v595
      %v634 = vpop.xlane.xlu0 %633
      %635 = vmax.xlane.f32.xlu0 %v598
      %v636 = vpop.xlane.xlu0 %635
      %637 = vmax.xlane.f32.xlu0 %v603
      %v638 = vpop.xlane.xlu0 %637
      %639 = vmax.xlane.f32.xlu0 %v606
      %v640 = vpop.xlane.xlu0 %639
      %v641 = vsub.f32 %v547, %v610
      %v642 = vsub.f32 %v550, %v612
      %v643 = vsub.f32 %v555, %v614
      %v644 = vsub.f32 %v558, %v616
      %v645 = vsub.f32 %v563, %v618
      %v646 = vsub.f32 %v566, %v620
      %v647 = vsub.f32 %v571, %v622
      %v648 = vsub.f32 %v574, %v624
      %v649 = vsub.f32 %v579, %v626
      %v650 = vsub.f32 %v582, %v628
      %v651 = vsub.f32 %v587, %v630
      %v652 = vsub.f32 %v590, %v632
      %v653 = vsub.f32 %v595, %v634
      %v654 = vsub.f32 %v598, %v636
      %v655 = vsub.f32 %v603, %v638
      %v656 = vsub.f32 %v606, %v640
      %v657 = vmul.f32 %v641, 1.442695
      %v658 = vpow.pop %v657
      %v659 = vmul.f32 %v642, 1.442695
      %v660 = vpow.pop %v659
      %v661 = vmul.f32 %v643, 1.442695
      %v662 = vpow.pop %v661
      %v663 = vmul.f32 %v644, 1.442695
      %v664 = vpow.pop %v663
      %v665 = vmul.f32 %v645, 1.442695
      %v666 = vpow.pop %v665
      %v667 = vmul.f32 %v646, 1.442695
      %v668 = vpow.pop %v667
      %v669 = vmul.f32 %v647, 1.442695
      %v670 = vpow.pop %v669
      %v671 = vmul.f32 %v648, 1.442695
      %v672 = vpow.pop %v671
      %v673 = vmul.f32 %v649, 1.442695
      %v674 = vpow.pop %v673
      %v675 = vmul.f32 %v650, 1.442695
      %v676 = vpow.pop %v675
      %v677 = vmul.f32 %v651, 1.442695
      %v678 = vpow.pop %v677
      %v679 = vmul.f32 %v652, 1.442695
      %v680 = vpow.pop %v679
      %v681 = vmul.f32 %v653, 1.442695
      %v682 = vpow.pop %v681
      %v683 = vmul.f32 %v654, 1.442695
      %v684 = vpow.pop %v683
      %v685 = vmul.f32 %v655, 1.442695
      %v686 = vpow.pop %v685
      %v687 = vmul.f32 %v656, 1.442695
      %v688 = vpow.pop %v687
      %689 = vadd.xlane.f32.xlu0 %v658
      %v690 = vpop.xlane.xlu0 %689
      %691 = vadd.xlane.f32.xlu0 %v660
      %v692 = vpop.xlane.xlu0 %691
      %693 = vadd.xlane.f32.xlu0 %v662
      %v694 = vpop.xlane.xlu0 %693
      %695 = vadd.xlane.f32.xlu0 %v664
      %v696 = vpop.xlane.xlu0 %695
      %697 = vadd.xlane.f32.xlu0 %v666
      %v698 = vpop.xlane.xlu0 %697
      %699 = vadd.xlane.f32.xlu0 %v668
      %v700 = vpop.xlane.xlu0 %699
      %701 = vadd.xlane.f32.xlu0 %v670
      %v702 = vpop.xlane.xlu0 %701
      %703 = vadd.xlane.f32.xlu0 %v672
      %v704 = vpop.xlane.xlu0 %703
      %705 = vadd.xlane.f32.xlu0 %v674
      %v706 = vpop.xlane.xlu0 %705
      %707 = vadd.xlane.f32.xlu0 %v676
      %v708 = vpop.xlane.xlu0 %707
      %709 = vadd.xlane.f32.xlu0 %v678
      %v710 = vpop.xlane.xlu0 %709
      %711 = vadd.xlane.f32.xlu0 %v680
      %v712 = vpop.xlane.xlu0 %711
      %713 = vadd.xlane.f32.xlu0 %v682
      %v714 = vpop.xlane.xlu0 %713
      %715 = vadd.xlane.f32.xlu0 %v684
      %v716 = vpop.xlane.xlu0 %715
      %717 = vadd.xlane.f32.xlu0 %v686
      %v718 = vpop.xlane.xlu0 %717
      %719 = vadd.xlane.f32.xlu0 %v688
      %v720 = vpop.xlane.xlu0 %719
      %v721 = vrcp.pop %v690
      %v722 = vrcp.pop %v692
      %v723 = vrcp.pop %v694
      %v724 = vrcp.pop %v696
      %v725 = vrcp.pop %v698
      %v726 = vrcp.pop %v700
      %v727 = vrcp.pop %v702
      %v728 = vrcp.pop %v704
      %v729 = vrcp.pop %v706
      %v730 = vrcp.pop %v708
      %v731 = vrcp.pop %v710
      %v732 = vrcp.pop %v712
      %v733 = vrcp.pop %v714
      %v734 = vrcp.pop %v716
      %v735 = vrcp.pop %v718
      %v736 = vrcp.pop %v720
      %v737 = vpack.c.bf16 %v660, %v658
      %v738 = vpack.c.bf16 %v664, %v662
      %v739 = vpack.c.bf16 %v668, %v666
      %v740 = vpack.c.bf16 %v672, %v670
      %v741 = vpack.c.bf16 %v676, %v674
      %v742 = vpack.c.bf16 %v680, %v678
      %v743 = vpack.c.bf16 %v684, %v682
      %v744 = vpack.c.bf16 %v688, %v686
      %745 = vrot.lane.b32.xlu0 %v427, 64
      %v746 = vpop.permute.xlu0 %745
      %747 = vrot.lane.b32.xlu0 %v428, 64
      %v748 = vpop.permute.xlu0 %747
      %749 = vrot.lane.b32.xlu0 %v429, 64
      %v750 = vpop.permute.xlu0 %749
      %751 = vrot.lane.b32.xlu0 %v430, 64
      %v752 = vpop.permute.xlu0 %751
      %753 = vrot.lane.b32.xlu0 %v431, 64
      %v754 = vpop.permute.xlu0 %753
      %755 = vrot.lane.b32.xlu0 %v432, 64
      %v756 = vpop.permute.xlu0 %755
      %757 = vrot.lane.b32.xlu0 %v433, 64
      %v758 = vpop.permute.xlu0 %757
      %759 = vrot.lane.b32.xlu0 %v434, 64
      %v760 = vpop.permute.xlu0 %759
      %769 = vmatprep.subr.bf16.mxu0 0
      %770 = vmatpush1.bf16.msra.mxu0 %v746
      %771 = vmatprep.subr.bf16.mxu0 0
      %772 = vmatpush1.bf16.msra.mxu0 %v748
      %773 = vmatprep.subr.bf16.mxu0 0
      %774 = vmatpush1.bf16.msra.mxu0 %v750
      %775 = vmatprep.subr.bf16.mxu0 0
      %776 = vmatpush1.bf16.msra.mxu0 %v752
      %777 = vmatprep.subr.bf16.mxu0 0
      %778 = vmatpush1.bf16.msra.mxu0 %v754
      %779 = vmatprep.subr.bf16.mxu0 0
      %780 = vmatpush1.bf16.msra.mxu0 %v756
      %781 = vmatprep.subr.bf16.mxu0 0
      %782 = vmatpush1.bf16.msra.mxu0 %v758
      %783 = vmatprep.subr.bf16.mxu0 0
      %784 = vmatpush1.bf16.msra.mxu0 %v760
      %785 = vmatprep.subr.bf16.mxu0 0
      %786 = vmatpush1.bf16.msra.mxu0 0
      %787 = vmatprep.subr.bf16.mxu0 0
      %788 = vmatpush1.bf16.msra.mxu0 0
      %789 = vmatprep.subr.bf16.mxu0 0
      %790 = vmatpush1.bf16.msra.mxu0 0
      %791 = vmatprep.subr.bf16.mxu0 0
      %792 = vmatpush1.bf16.msra.mxu0 0
      %793 = vmatprep.subr.bf16.mxu0 0
      %794 = vmatpush1.bf16.msra.mxu0 0
      %795 = vmatprep.subr.bf16.mxu0 0
      %796 = vmatpush1.bf16.msra.mxu0 0
      %797 = vmatprep.subr.bf16.mxu0 0
      %798 = vmatpush1.bf16.msra.mxu0 0
      %799 = vmatprep.subr.bf16.mxu0 0
      %800 = vmatpush1.bf16.msra.mxu0 0
      %801 = vmatprep.mubr.bf16.mxu0 0
      %802 = vmatmul.mubr.bf16.gmra.mrb[0].mxu0 %v737
      %v803 = vpop.f32.mrb[0].mxu0
      %v804 = vadd.f32 0.0, %v803
      %v805 = vpop.f32.mrb[0].mxu0
      %v806 = vpop.f32.mrb[0].mxu0
      %v807 = vadd.f32 0.0, %v806
      %v808 = vpop.f32.mrb[0].mxu0
      %809 = vmatprep.mubr.bf16.mxu0 0
      %810 = vmatmul.mubr.bf16.gmra.mrb[0].mxu0 %v738
      %v811 = vpop.f32.mrb[0].mxu0
      %v812 = vadd.f32 0.0, %v811
      %v813 = vpop.f32.mrb[0].mxu0
      %v814 = vpop.f32.mrb[0].mxu0
      %v815 = vadd.f32 0.0, %v814
      %v816 = vpop.f32.mrb[0].mxu0
      %817 = vmatprep.mubr.bf16.mxu0 0
      %818 = vmatmul.mubr.bf16.gmra.mrb[0].mxu0 %v739
      %v819 = vpop.f32.mrb[0].mxu0
      %v820 = vadd.f32 0.0, %v819
      %v821 = vpop.f32.mrb[0].mxu0
      %v822 = vpop.f32.mrb[0].mxu0
      %v823 = vadd.f32 0.0, %v822
      %v824 = vpop.f32.mrb[0].mxu0
      %825 = vmatprep.mubr.bf16.mxu0 0
      %826 = vmatmul.mubr.bf16.gmra.mrb[0].mxu0 %v740
      %v827 = vpop.f32.mrb[0].mxu0
      %v828 = vadd.f32 0.0, %v827
      %v829 = vpop.f32.mrb[0].mxu0
      %v830 = vpop.f32.mrb[0].mxu0
      %v831 = vadd.f32 0.0, %v830
      %v832 = vpop.f32.mrb[0].mxu0
      %833 = vmatprep.mubr.bf16.mxu0 0
      %834 = vmatmul.mubr.bf16.gmra.mrb[0].mxu0 %v741
      %v835 = vpop.f32.mrb[0].mxu0
      %v836 = vadd.f32 0.0, %v835
      %v837 = vpop.f32.mrb[0].mxu0
      %v838 = vpop.f32.mrb[0].mxu0
      %v839 = vadd.f32 0.0, %v838
      %v840 = vpop.f32.mrb[0].mxu0
      %841 = vmatprep.mubr.bf16.mxu0 0
      %842 = vmatmul.mubr.bf16.gmra.mrb[0].mxu0 %v742
      %v843 = vpop.f32.mrb[0].mxu0
      %v844 = vadd.f32 0.0, %v843
      %v845 = vpop.f32.mrb[0].mxu0
      %v846 = vpop.f32.mrb[0].mxu0
      %v847 = vadd.f32 0.0, %v846
      %v848 = vpop.f32.mrb[0].mxu0
      %849 = vmatprep.mubr.bf16.mxu0 0
      %850 = vmatmul.mubr.bf16.gmra.mrb[0].mxu0 %v743
      %v851 = vpop.f32.mrb[0].mxu0
      %v852 = vadd.f32 0.0, %v851
      %v853 = vpop.f32.mrb[0].mxu0
      %v854 = vpop.f32.mrb[0].mxu0
      %v855 = vadd.f32 0.0, %v854
      %v856 = vpop.f32.mrb[0].mxu0
      %857 = vmatprep.mubr.bf16.mxu0 0
      %858 = vmatmul.mubr.bf16.gmra.mrb[0].mxu0 %v744
      %v859 = vpop.f32.mrb[0].mxu0
      %v860 = vadd.f32 0.0, %v859
      %v861 = vpop.f32.mrb[0].mxu0
      %v862 = vpop.f32.mrb[0].mxu0
      %v863 = vadd.f32 0.0, %v862
      %v864 = vpop.f32.mrb[0].mxu0
      %865 = vdwg.mxu0
      %v866 = vmul.f32 %v804, %v721
      %v867 = vmul.f32 %v807, %v722
      %v868 = vmul.f32 %v812, %v723
      %v869 = vmul.f32 %v815, %v724
      %v870 = vmul.f32 %v820, %v725
      %v871 = vmul.f32 %v823, %v726
      %v872 = vmul.f32 %v828, %v727
      %v873 = vmul.f32 %v831, %v728
      %v874 = vmul.f32 %v836, %v729
      %v875 = vmul.f32 %v839, %v730
      %v876 = vmul.f32 %v844, %v731
      %v877 = vmul.f32 %v847, %v732
      %v878 = vmul.f32 %v852, %v733
      %v879 = vmul.f32 %v855, %v734
      %v880 = vmul.f32 %v860, %v735
      %v881 = vmul.f32 %v863, %v736
      %v882 = vpack.c.bf16 %v867, %v866
      %v883 = vpack.c.bf16 %v869, %v868
      %v884 = vpack.c.bf16 %v871, %v870
      %v885 = vpack.c.bf16 %v873, %v872
      %v886 = vpack.c.bf16 %v875, %v874
      %v887 = vpack.c.bf16 %v877, %v876
      %v888 = vpack.c.bf16 %v879, %v878
      %v889 = vpack.c.bf16 %v881, %v880
      %890 = vrot.lane.b32.xlu0 %v427, 120
      %v891 = vpop.permute.xlu0 %890
      %892 = vrot.lane.b32.xlu0 %v428, 120
      %v893 = vpop.permute.xlu0 %892
      %894 = vrot.lane.b32.xlu0 %v429, 120
      %v895 = vpop.permute.xlu0 %894
      %896 = vrot.lane.b32.xlu0 %v430, 120
      %v897 = vpop.permute.xlu0 %896
      %898 = vrot.lane.b32.xlu0 %v431, 120
      %v899 = vpop.permute.xlu0 %898
      %900 = vrot.lane.b32.xlu0 %v432, 120
      %v901 = vpop.permute.xlu0 %900
      %902 = vrot.lane.b32.xlu0 %v433, 120
      %v903 = vpop.permute.xlu0 %902
      %904 = vrot.lane.b32.xlu0 %v434, 120
      %v905 = vpop.permute.xlu0 %904
      %906 = vrot.lane.b32.xlu0 %v427, 88
      %v907 = vpop.permute.xlu0 %906
      %908 = vrot.lane.b32.xlu0 %v428, 88
      %v909 = vpop.permute.xlu0 %908
      %910 = vrot.lane.b32.xlu0 %v429, 88
      %v911 = vpop.permute.xlu0 %910
      %912 = vrot.lane.b32.xlu0 %v430, 88
      %v913 = vpop.permute.xlu0 %912
      %914 = vrot.lane.b32.xlu0 %v431, 88
      %v915 = vpop.permute.xlu0 %914
      %916 = vrot.lane.b32.xlu0 %v432, 88
      %v917 = vpop.permute.xlu0 %916
      %918 = vrot.lane.b32.xlu0 %v433, 88
      %v919 = vpop.permute.xlu0 %918
      %920 = vrot.lane.b32.xlu0 %v434, 88
      %v921 = vpop.permute.xlu0 %920
      %v923 = vsel %vm463, %v891, 0
      %v926 = vsel %vm463, %v893, 0
      %v929 = vsel %vm463, %v895, 0
      %v932 = vsel %vm463, %v897, 0
      %v935 = vsel %vm463, %v899, 0
      %v938 = vsel %vm463, %v901, 0
      %v941 = vsel %vm463, %v903, 0
      %v944 = vsel %vm463, %v905, 0
      %v947 = vsel %vm463, %v907, 0
      %v950 = vsel %vm463, %v909, 0
      %v953 = vsel %vm463, %v911, 0
      %v956 = vsel %vm463, %v913, 0
      %v959 = vsel %vm463, %v915, 0
      %v962 = vsel %vm463, %v917, 0
      %v965 = vsel %vm463, %v919, 0
      %v968 = vsel %vm463, %v921, 0
      %970 = vmatprep.subr.bf16.mxu0 0
      %971 = vmatpush1.bf16.xpose.msra.mxu0 %v947
      %972 = vmatprep.subr.bf16.mxu0 0
      %973 = vmatpush1.bf16.xpose.msra.mxu0 %v950
      %974 = vmatprep.subr.bf16.mxu0 0
      %975 = vmatpush1.bf16.xpose.msra.mxu0 %v953
      %976 = vmatprep.subr.bf16.mxu0 0
      %977 = vmatpush1.bf16.xpose.msra.mxu0 %v956
      %978 = vmatprep.subr.bf16.mxu0 0
      %979 = vmatpush1.bf16.xpose.msra.mxu0 %v959
      %980 = vmatprep.subr.bf16.mxu0 0
      %981 = vmatpush1.bf16.xpose.msra.mxu0 %v962
      %982 = vmatprep.subr.bf16.mxu0 0
      %983 = vmatpush1.bf16.xpose.msra.mxu0 %v965
      %984 = vmatprep.subr.bf16.mxu0 0
      %985 = vmatpush1.bf16.xpose.msra.mxu0 %v968
      %986 = vmatprep.subr.bf16.mxu0 0
      %987 = vmatpush1.bf16.xpose.msra.mxu0 0
      %988 = vmatprep.subr.bf16.mxu0 0
      %989 = vmatpush1.bf16.xpose.msra.mxu0 0
      %990 = vmatprep.subr.bf16.mxu0 0
      %991 = vmatpush1.bf16.xpose.msra.mxu0 0
      %992 = vmatprep.subr.bf16.mxu0 0
      %993 = vmatpush1.bf16.xpose.msra.mxu0 0
      %994 = vmatprep.subr.bf16.mxu0 0
      %995 = vmatpush1.bf16.xpose.msra.mxu0 0
      %996 = vmatprep.subr.bf16.mxu0 0
      %997 = vmatpush1.bf16.xpose.msra.mxu0 0
      %998 = vmatprep.subr.bf16.mxu0 0
      %999 = vmatpush1.bf16.xpose.msra.mxu0 0
      %1000 = vmatprep.subr.bf16.mxu0 0
      %1001 = vmatpush1.bf16.xpose.msra.mxu0 0
      %1002 = vmatprep.mubr.bf16.mxu0 0
      %1003 = vmatmul.mubr.bf16.gmra.mrb[0].mxu0 %v923
      %v1004 = vpop.f32.mrb[0].mxu0
      %v1005 = vadd.f32 %v438, %v1004
      %v1006 = vpop.f32.mrb[0].mxu0
      %v1007 = vpop.f32.mrb[0].mxu0
      %v1008 = vadd.f32 %v438, %v1007
      %v1009 = vpop.f32.mrb[0].mxu0
      %1010 = vmatprep.mubr.bf16.mxu0 0
      %1011 = vmatmul.mubr.bf16.gmra.mrb[0].mxu0 %v926
      %v1012 = vpop.f32.mrb[0].mxu0
      %v1013 = vadd.f32 %v438, %v1012
      %v1014 = vpop.f32.mrb[0].mxu0
      %v1015 = vpop.f32.mrb[0].mxu0
      %v1016 = vadd.f32 %v438, %v1015
      %v1017 = vpop.f32.mrb[0].mxu0
      %1018 = vmatprep.mubr.bf16.mxu0 0
      %1019 = vmatmul.mubr.bf16.gmra.mrb[0].mxu0 %v929
      %v1020 = vpop.f32.mrb[0].mxu0
      %v1021 = vadd.f32 %v438, %v1020
      %v1022 = vpop.f32.mrb[0].mxu0
      %v1023 = vpop.f32.mrb[0].mxu0
      %v1024 = vadd.f32 %v438, %v1023
      %v1025 = vpop.f32.mrb[0].mxu0
      %1026 = vmatprep.mubr.bf16.mxu0 0
      %1027 = vmatmul.mubr.bf16.gmra.mrb[0].mxu0 %v932
      %v1028 = vpop.f32.mrb[0].mxu0
      %v1029 = vadd.f32 %v438, %v1028
      %v1030 = vpop.f32.mrb[0].mxu0
      %v1031 = vpop.f32.mrb[0].mxu0
      %v1032 = vadd.f32 %v438, %v1031
      %v1033 = vpop.f32.mrb[0].mxu0
      %1034 = vmatprep.mubr.bf16.mxu0 0
      %1035 = vmatmul.mubr.bf16.gmra.mrb[0].mxu0 %v935
      %v1036 = vpop.f32.mrb[0].mxu0
      %v1037 = vadd.f32 %v438, %v1036
      %v1038 = vpop.f32.mrb[0].mxu0
      %v1039 = vpop.f32.mrb[0].mxu0
      %v1040 = vadd.f32 %v438, %v1039
      %v1041 = vpop.f32.mrb[0].mxu0
      %1042 = vmatprep.mubr.bf16.mxu0 0
      %1043 = vmatmul.mubr.bf16.gmra.mrb[0].mxu0 %v938
      %v1044 = vpop.f32.mrb[0].mxu0
      %v1045 = vadd.f32 %v438, %v1044
      %v1046 = vpop.f32.mrb[0].mxu0
      %v1047 = vpop.f32.mrb[0].mxu0
      %v1048 = vadd.f32 %v438, %v1047
      %v1049 = vpop.f32.mrb[0].mxu0
      %1050 = vmatprep.mubr.bf16.mxu0 0
      %1051 = vmatmul.mubr.bf16.gmra.mrb[0].mxu0 %v941
      %v1052 = vpop.f32.mrb[0].mxu0
      %v1053 = vadd.f32 %v438, %v1052
      %v1054 = vpop.f32.mrb[0].mxu0
      %v1055 = vpop.f32.mrb[0].mxu0
      %v1056 = vadd.f32 %v438, %v1055
      %v1057 = vpop.f32.mrb[0].mxu0
      %1058 = vmatprep.mubr.bf16.mxu0 0
      %1059 = vmatmul.mubr.bf16.gmra.mrb[0].mxu0 %v944
      %v1060 = vpop.f32.mrb[0].mxu0
      %v1061 = vadd.f32 %v438, %v1060
      %v1062 = vpop.f32.mrb[0].mxu0
      %v1063 = vpop.f32.mrb[0].mxu0
      %v1064 = vadd.f32 %v438, %v1063
      %v1065 = vpop.f32.mrb[0].mxu0
      %1066 = vdwg.mxu0
      %1067 = vmax.xlane.f32.xlu0 %v1005
      %v1068 = vpop.xlane.xlu0 %1067
      %1069 = vmax.xlane.f32.xlu0 %v1008
      %v1070 = vpop.xlane.xlu0 %1069
      %1071 = vmax.xlane.f32.xlu0 %v1013
      %v1072 = vpop.xlane.xlu0 %1071
      %1073 = vmax.xlane.f32.xlu0 %v1016
      %v1074 = vpop.xlane.xlu0 %1073
      %1075 = vmax.xlane.f32.xlu0 %v1021
      %v1076 = vpop.xlane.xlu0 %1075
      %1077 = vmax.xlane.f32.xlu0 %v1024
      %v1078 = vpop.xlane.xlu0 %1077
      %1079 = vmax.xlane.f32.xlu0 %v1029
      %v1080 = vpop.xlane.xlu0 %1079
      %1081 = vmax.xlane.f32.xlu0 %v1032
      %v1082 = vpop.xlane.xlu0 %1081
      %1083 = vmax.xlane.f32.xlu0 %v1037
      %v1084 = vpop.xlane.xlu0 %1083
      %1085 = vmax.xlane.f32.xlu0 %v1040
      %v1086 = vpop.xlane.xlu0 %1085
      %1087 = vmax.xlane.f32.xlu0 %v1045
      %v1088 = vpop.xlane.xlu0 %1087
      %1089 = vmax.xlane.f32.xlu0 %v1048
      %v1090 = vpop.xlane.xlu0 %1089
      %1091 = vmax.xlane.f32.xlu0 %v1053
      %v1092 = vpop.xlane.xlu0 %1091
      %1093 = vmax.xlane.f32.xlu0 %v1056
      %v1094 = vpop.xlane.xlu0 %1093
      %1095 = vmax.xlane.f32.xlu0 %v1061
      %v1096 = vpop.xlane.xlu0 %1095
      %1097 = vmax.xlane.f32.xlu0 %v1064
      %v1098 = vpop.xlane.xlu0 %1097
      %v1099 = vsub.f32 %v1005, %v1068
      %v1100 = vsub.f32 %v1008, %v1070
      %v1101 = vsub.f32 %v1013, %v1072
      %v1102 = vsub.f32 %v1016, %v1074
      %v1103 = vsub.f32 %v1021, %v1076
      %v1104 = vsub.f32 %v1024, %v1078
      %v1105 = vsub.f32 %v1029, %v1080
      %v1106 = vsub.f32 %v1032, %v1082
      %v1107 = vsub.f32 %v1037, %v1084
      %v1108 = vsub.f32 %v1040, %v1086
      %v1109 = vsub.f32 %v1045, %v1088
      %v1110 = vsub.f32 %v1048, %v1090
      %v1111 = vsub.f32 %v1053, %v1092
      %v1112 = vsub.f32 %v1056, %v1094
      %v1113 = vsub.f32 %v1061, %v1096
      %v1114 = vsub.f32 %v1064, %v1098
      %v1115 = vmul.f32 %v1099, 1.442695
      %v1116 = vpow.pop %v1115
      %v1117 = vmul.f32 %v1100, 1.442695
      %v1118 = vpow.pop %v1117
      %v1119 = vmul.f32 %v1101, 1.442695
      %v1120 = vpow.pop %v1119
      %v1121 = vmul.f32 %v1102, 1.442695
      %v1122 = vpow.pop %v1121
      %v1123 = vmul.f32 %v1103, 1.442695
      %v1124 = vpow.pop %v1123
      %v1125 = vmul.f32 %v1104, 1.442695
      %v1126 = vpow.pop %v1125
      %v1127 = vmul.f32 %v1105, 1.442695
      %v1128 = vpow.pop %v1127
      %v1129 = vmul.f32 %v1106, 1.442695
      %v1130 = vpow.pop %v1129
      %v1131 = vmul.f32 %v1107, 1.442695
      %v1132 = vpow.pop %v1131
      %v1133 = vmul.f32 %v1108, 1.442695
      %v1134 = vpow.pop %v1133
      %v1135 = vmul.f32 %v1109, 1.442695
      %v1136 = vpow.pop %v1135
      %v1137 = vmul.f32 %v1110, 1.442695
      %v1138 = vpow.pop %v1137
      %v1139 = vmul.f32 %v1111, 1.442695
      %v1140 = vpow.pop %v1139
      %v1141 = vmul.f32 %v1112, 1.442695
      %v1142 = vpow.pop %v1141
      %v1143 = vmul.f32 %v1113, 1.442695
      %v1144 = vpow.pop %v1143
      %v1145 = vmul.f32 %v1114, 1.442695
      %v1146 = vpow.pop %v1145
      %1147 = vadd.xlane.f32.xlu0 %v1116
      %v1148 = vpop.xlane.xlu0 %1147
      %1149 = vadd.xlane.f32.xlu0 %v1118
      %v1150 = vpop.xlane.xlu0 %1149
      %1151 = vadd.xlane.f32.xlu0 %v1120
      %v1152 = vpop.xlane.xlu0 %1151
      %1153 = vadd.xlane.f32.xlu0 %v1122
      %v1154 = vpop.xlane.xlu0 %1153
      %1155 = vadd.xlane.f32.xlu0 %v1124
      %v1156 = vpop.xlane.xlu0 %1155
      %1157 = vadd.xlane.f32.xlu0 %v1126
      %v1158 = vpop.xlane.xlu0 %1157
      %1159 = vadd.xlane.f32.xlu0 %v1128
      %v1160 = vpop.xlane.xlu0 %1159
      %1161 = vadd.xlane.f32.xlu0 %v1130
      %v1162 = vpop.xlane.xlu0 %1161
      %1163 = vadd.xlane.f32.xlu0 %v1132
      %v1164 = vpop.xlane.xlu0 %1163
      %1165 = vadd.xlane.f32.xlu0 %v1134
      %v1166 = vpop.xlane.xlu0 %1165
      %1167 = vadd.xlane.f32.xlu0 %v1136
      %v1168 = vpop.xlane.xlu0 %1167
      %1169 = vadd.xlane.f32.xlu0 %v1138
      %v1170 = vpop.xlane.xlu0 %1169
      %1171 = vadd.xlane.f32.xlu0 %v1140
      %v1172 = vpop.xlane.xlu0 %1171
      %1173 = vadd.xlane.f32.xlu0 %v1142
      %v1174 = vpop.xlane.xlu0 %1173
      %1175 = vadd.xlane.f32.xlu0 %v1144
      %v1176 = vpop.xlane.xlu0 %1175
      %1177 = vadd.xlane.f32.xlu0 %v1146
      %v1178 = vpop.xlane.xlu0 %1177
      %v1179 = vrcp.pop %v1148
      %v1180 = vrcp.pop %v1150
      %v1181 = vrcp.pop %v1152
      %v1182 = vrcp.pop %v1154
      %v1183 = vrcp.pop %v1156
      %v1184 = vrcp.pop %v1158
      %v1185 = vrcp.pop %v1160
      %v1186 = vrcp.pop %v1162
      %v1187 = vrcp.pop %v1164
      %v1188 = vrcp.pop %v1166
      %v1189 = vrcp.pop %v1168
      %v1190 = vrcp.pop %v1170
      %v1191 = vrcp.pop %v1172
      %v1192 = vrcp.pop %v1174
      %v1193 = vrcp.pop %v1176
      %v1194 = vrcp.pop %v1178
      %v1195 = vpack.c.bf16 %v1118, %v1116
      %v1196 = vpack.c.bf16 %v1122, %v1120
      %v1197 = vpack.c.bf16 %v1126, %v1124
      %v1198 = vpack.c.bf16 %v1130, %v1128
      %v1199 = vpack.c.bf16 %v1134, %v1132
      %v1200 = vpack.c.bf16 %v1138, %v1136
      %v1201 = vpack.c.bf16 %v1142, %v1140
      %v1202 = vpack.c.bf16 %v1146, %v1144
      %1203 = vrot.lane.b32.xlu0 %v427, 56
      %v1204 = vpop.permute.xlu0 %1203
      %1205 = vrot.lane.b32.xlu0 %v428, 56
      %v1206 = vpop.permute.xlu0 %1205
      %1207 = vrot.lane.b32.xlu0 %v429, 56
      %v1208 = vpop.permute.xlu0 %1207
      %1209 = vrot.lane.b32.xlu0 %v430, 56
      %v1210 = vpop.permute.xlu0 %1209
      %1211 = vrot.lane.b32.xlu0 %v431, 56
      %v1212 = vpop.permute.xlu0 %1211
      %1213 = vrot.lane.b32.xlu0 %v432, 56
      %v1214 = vpop.permute.xlu0 %1213
      %1215 = vrot.lane.b32.xlu0 %v433, 56
      %v1216 = vpop.permute.xlu0 %1215
      %1217 = vrot.lane.b32.xlu0 %v434, 56
      %v1218 = vpop.permute.xlu0 %1217
      %1227 = vmatprep.subr.bf16.mxu0 0
      %1228 = vmatpush1.bf16.msra.mxu0 %v1204
      %1229 = vmatprep.subr.bf16.mxu0 0
      %1230 = vmatpush1.bf16.msra.mxu0 %v1206
      %1231 = vmatprep.subr.bf16.mxu0 0
      %1232 = vmatpush1.bf16.msra.mxu0 %v1208
      %1233 = vmatprep.subr.bf16.mxu0 0
      %1234 = vmatpush1.bf16.msra.mxu0 %v1210
      %1235 = vmatprep.subr.bf16.mxu0 0
      %1236 = vmatpush1.bf16.msra.mxu0 %v1212
      %1237 = vmatprep.subr.bf16.mxu0 0
      %1238 = vmatpush1.bf16.msra.mxu0 %v1214
      %1239 = vmatprep.subr.bf16.mxu0 0
      %1240 = vmatpush1.bf16.msra.mxu0 %v1216
      %1241 = vmatprep.subr.bf16.mxu0 0
      %1242 = vmatpush1.bf16.msra.mxu0 %v1218
      %1243 = vmatprep.subr.bf16.mxu0 0
      %1244 = vmatpush1.bf16.msra.mxu0 0
      %1245 = vmatprep.subr.bf16.mxu0 0
      %1246 = vmatpush1.bf16.msra.mxu0 0
      %1247 = vmatprep.subr.bf16.mxu0 0
      %1248 = vmatpush1.bf16.msra.mxu0 0
      %1249 = vmatprep.subr.bf16.mxu0 0
      %1250 = vmatpush1.bf16.msra.mxu0 0
      %1251 = vmatprep.subr.bf16.mxu0 0
      %1252 = vmatpush1.bf16.msra.mxu0 0
      %1253 = vmatprep.subr.bf16.mxu0 0
      %1254 = vmatpush1.bf16.msra.mxu0 0
      %1255 = vmatprep.subr.bf16.mxu0 0
      %1256 = vmatpush1.bf16.msra.mxu0 0
      %1257 = vmatprep.subr.bf16.mxu0 0
      %1258 = vmatpush1.bf16.msra.mxu0 0
      %1259 = vmatprep.mubr.bf16.mxu0 0
      %1260 = vmatmul.mubr.bf16.gmra.mrb[0].mxu0 %v1195
      %v1261 = vpop.f32.mrb[0].mxu0
      %v1262 = vadd.f32 0.0, %v1261
      %v1263 = vpop.f32.mrb[0].mxu0
      %v1264 = vpop.f32.mrb[0].mxu0
      %v1265 = vadd.f32 0.0, %v1264
      %v1266 = vpop.f32.mrb[0].mxu0
      %1267 = vmatprep.mubr.bf16.mxu0 0
      %1268 = vmatmul.mubr.bf16.gmra.mrb[0].mxu0 %v1196
      %v1269 = vpop.f32.mrb[0].mxu0
      %v1270 = vadd.f32 0.0, %v1269
      %v1271 = vpop.f32.mrb[0].mxu0
      %v1272 = vpop.f32.mrb[0].mxu0
      %v1273 = vadd.f32 0.0, %v1272
      %v1274 = vpop.f32.mrb[0].mxu0
      %1275 = vmatprep.mubr.bf16.mxu0 0
      %1276 = vmatmul.mubr.bf16.gmra.mrb[0].mxu0 %v1197
      %v1277 = vpop.f32.mrb[0].mxu0
      %v1278 = vadd.f32 0.0, %v1277
      %v1279 = vpop.f32.mrb[0].mxu0
      %v1280 = vpop.f32.mrb[0].mxu0
      %v1281 = vadd.f32 0.0, %v1280
      %v1282 = vpop.f32.mrb[0].mxu0
      %1283 = vmatprep.mubr.bf16.mxu0 0
      %1284 = vmatmul.mubr.bf16.gmra.mrb[0].mxu0 %v1198
      %v1285 = vpop.f32.mrb[0].mxu0
      %v1286 = vadd.f32 0.0, %v1285
      %v1287 = vpop.f32.mrb[0].mxu0
      %v1288 = vpop.f32.mrb[0].mxu0
      %v1289 = vadd.f32 0.0, %v1288
      %v1290 = vpop.f32.mrb[0].mxu0
      %1291 = vmatprep.mubr.bf16.mxu0 0
      %1292 = vmatmul.mubr.bf16.gmra.mrb[0].mxu0 %v1199
      %v1293 = vpop.f32.mrb[0].mxu0
      %v1294 = vadd.f32 0.0, %v1293
      %v1295 = vpop.f32.mrb[0].mxu0
      %v1296 = vpop.f32.mrb[0].mxu0
      %v1297 = vadd.f32 0.0, %v1296
      %v1298 = vpop.f32.mrb[0].mxu0
      %1299 = vmatprep.mubr.bf16.mxu0 0
      %1300 = vmatmul.mubr.bf16.gmra.mrb[0].mxu0 %v1200
      %v1301 = vpop.f32.mrb[0].mxu0
      %v1302 = vadd.f32 0.0, %v1301
      %v1303 = vpop.f32.mrb[0].mxu0
      %v1304 = vpop.f32.mrb[0].mxu0
      %v1305 = vadd.f32 0.0, %v1304
      %v1306 = vpop.f32.mrb[0].mxu0
      %1307 = vmatprep.mubr.bf16.mxu0 0
      %1308 = vmatmul.mubr.bf16.gmra.mrb[0].mxu0 %v1201
      %v1309 = vpop.f32.mrb[0].mxu0
      %v1310 = vadd.f32 0.0, %v1309
      %v1311 = vpop.f32.mrb[0].mxu0
      %v1312 = vpop.f32.mrb[0].mxu0
      %v1313 = vadd.f32 0.0, %v1312
      %v1314 = vpop.f32.mrb[0].mxu0
      %1315 = vmatprep.mubr.bf16.mxu0 0
      %1316 = vmatmul.mubr.bf16.gmra.mrb[0].mxu0 %v1202
      %v1317 = vpop.f32.mrb[0].mxu0
      %v1318 = vadd.f32 0.0, %v1317
      %v1319 = vpop.f32.mrb[0].mxu0
      %v1320 = vpop.f32.mrb[0].mxu0
      %v1321 = vadd.f32 0.0, %v1320
      %v1322 = vpop.f32.mrb[0].mxu0
      %1323 = vdwg.mxu0
      %v1324 = vmul.f32 %v1262, %v1179
      %v1325 = vmul.f32 %v1265, %v1180
      %v1326 = vmul.f32 %v1270, %v1181
      %v1327 = vmul.f32 %v1273, %v1182
      %v1328 = vmul.f32 %v1278, %v1183
      %v1329 = vmul.f32 %v1281, %v1184
      %v1330 = vmul.f32 %v1286, %v1185
      %v1331 = vmul.f32 %v1289, %v1186
      %v1332 = vmul.f32 %v1294, %v1187
      %v1333 = vmul.f32 %v1297, %v1188
      %v1334 = vmul.f32 %v1302, %v1189
      %v1335 = vmul.f32 %v1305, %v1190
      %v1336 = vmul.f32 %v1310, %v1191
      %v1337 = vmul.f32 %v1313, %v1192
      %v1338 = vmul.f32 %v1318, %v1193
      %v1339 = vmul.f32 %v1321, %v1194
      %v1340 = vpack.c.bf16 %v1325, %v1324
      %v1341 = vpack.c.bf16 %v1327, %v1326
      %v1342 = vpack.c.bf16 %v1329, %v1328
      %v1343 = vpack.c.bf16 %v1331, %v1330
      %v1344 = vpack.c.bf16 %v1333, %v1332
      %v1345 = vpack.c.bf16 %v1335, %v1334
      %v1346 = vpack.c.bf16 %v1337, %v1336
      %v1347 = vpack.c.bf16 %v1339, %v1338
      %1348 = vrot.lane.b32.xlu0 %v427, 112
      %v1349 = vpop.permute.xlu0 %1348
      %1350 = vrot.lane.b32.xlu0 %v428, 112
      %v1351 = vpop.permute.xlu0 %1350
      %1352 = vrot.lane.b32.xlu0 %v429, 112
      %v1353 = vpop.permute.xlu0 %1352
      %1354 = vrot.lane.b32.xlu0 %v430, 112
      %v1355 = vpop.permute.xlu0 %1354
      %1356 = vrot.lane.b32.xlu0 %v431, 112
      %v1357 = vpop.permute.xlu0 %1356
      %1358 = vrot.lane.b32.xlu0 %v432, 112
      %v1359 = vpop.permute.xlu0 %1358
      %1360 = vrot.lane.b32.xlu0 %v433, 112
      %v1361 = vpop.permute.xlu0 %1360
      %1362 = vrot.lane.b32.xlu0 %v434, 112
      %v1363 = vpop.permute.xlu0 %1362
      %1364 = vrot.lane.b32.xlu0 %v427, 80
      %v1365 = vpop.permute.xlu0 %1364
      %1366 = vrot.lane.b32.xlu0 %v428, 80
      %v1367 = vpop.permute.xlu0 %1366
      %1368 = vrot.lane.b32.xlu0 %v429, 80
      %v1369 = vpop.permute.xlu0 %1368
      %1370 = vrot.lane.b32.xlu0 %v430, 80
      %v1371 = vpop.permute.xlu0 %1370
      %1372 = vrot.lane.b32.xlu0 %v431, 80
      %v1373 = vpop.permute.xlu0 %1372
      %1374 = vrot.lane.b32.xlu0 %v432, 80
      %v1375 = vpop.permute.xlu0 %1374
      %1376 = vrot.lane.b32.xlu0 %v433, 80
      %v1377 = vpop.permute.xlu0 %1376
      %1378 = vrot.lane.b32.xlu0 %v434, 80
      %v1379 = vpop.permute.xlu0 %1378
      %v1381 = vsel %vm463, %v1349, 0
      %v1384 = vsel %vm463, %v1351, 0
      %v1387 = vsel %vm463, %v1353, 0
      %v1390 = vsel %vm463, %v1355, 0
      %v1393 = vsel %vm463, %v1357, 0
      %v1396 = vsel %vm463, %v1359, 0
      %v1399 = vsel %vm463, %v1361, 0
      %v1402 = vsel %vm463, %v1363, 0
      %v1405 = vsel %vm463, %v1365, 0
      %v1408 = vsel %vm463, %v1367, 0
      %v1411 = vsel %vm463, %v1369, 0
      %v1414 = vsel %vm463, %v1371, 0
      %v1417 = vsel %vm463, %v1373, 0
      %v1420 = vsel %vm463, %v1375, 0
      %v1423 = vsel %vm463, %v1377, 0
      %v1426 = vsel %vm463, %v1379, 0
      %1428 = vmatprep.subr.bf16.mxu0 0
      %1429 = vmatpush1.bf16.xpose.msra.mxu0 %v1405
      %1430 = vmatprep.subr.bf16.mxu0 0
      %1431 = vmatpush1.bf16.xpose.msra.mxu0 %v1408
      %1432 = vmatprep.subr.bf16.mxu0 0
      %1433 = vmatpush1.bf16.xpose.msra.mxu0 %v1411
      %1434 = vmatprep.subr.bf16.mxu0 0
      %1435 = vmatpush1.bf16.xpose.msra.mxu0 %v1414
      %1436 = vmatprep.subr.bf16.mxu0 0
      %1437 = vmatpush1.bf16.xpose.msra.mxu0 %v1417
      %1438 = vmatprep.subr.bf16.mxu0 0
      %1439 = vmatpush1.bf16.xpose.msra.mxu0 %v1420
      %1440 = vmatprep.subr.bf16.mxu0 0
      %1441 = vmatpush1.bf16.xpose.msra.mxu0 %v1423
      %1442 = vmatprep.subr.bf16.mxu0 0
      %1443 = vmatpush1.bf16.xpose.msra.mxu0 %v1426
      %1444 = vmatprep.subr.bf16.mxu0 0
      %1445 = vmatpush1.bf16.xpose.msra.mxu0 0
      %1446 = vmatprep.subr.bf16.mxu0 0
      %1447 = vmatpush1.bf16.xpose.msra.mxu0 0
      %1448 = vmatprep.subr.bf16.mxu0 0
      %1449 = vmatpush1.bf16.xpose.msra.mxu0 0
      %1450 = vmatprep.subr.bf16.mxu0 0
      %1451 = vmatpush1.bf16.xpose.msra.mxu0 0
      %1452 = vmatprep.subr.bf16.mxu0 0
      %1453 = vmatpush1.bf16.xpose.msra.mxu0 0
      %1454 = vmatprep.subr.bf16.mxu0 0
      %1455 = vmatpush1.bf16.xpose.msra.mxu0 0
      %1456 = vmatprep.subr.bf16.mxu0 0
      %1457 = vmatpush1.bf16.xpose.msra.mxu0 0
      %1458 = vmatprep.subr.bf16.mxu0 0
      %1459 = vmatpush1.bf16.xpose.msra.mxu0 0
      %1460 = vmatprep.mubr.bf16.mxu0 0
      %1461 = vmatmul.mubr.bf16.gmra.mrb[0].mxu0 %v1381
      %v1462 = vpop.f32.mrb[0].mxu0
      %v1463 = vadd.f32 %v438, %v1462
      %v1464 = vpop.f32.mrb[0].mxu0
      %v1465 = vpop.f32.mrb[0].mxu0
      %v1466 = vadd.f32 %v438, %v1465
      %v1467 = vpop.f32.mrb[0].mxu0
      %1468 = vmatprep.mubr.bf16.mxu0 0
      %1469 = vmatmul.mubr.bf16.gmra.mrb[0].mxu0 %v1384
      %v1470 = vpop.f32.mrb[0].mxu0
      %v1471 = vadd.f32 %v438, %v1470
      %v1472 = vpop.f32.mrb[0].mxu0
      %v1473 = vpop.f32.mrb[0].mxu0
      %v1474 = vadd.f32 %v438, %v1473
      %v1475 = vpop.f32.mrb[0].mxu0
      %1476 = vmatprep.mubr.bf16.mxu0 0
      %1477 = vmatmul.mubr.bf16.gmra.mrb[0].mxu0 %v1387
      %v1478 = vpop.f32.mrb[0].mxu0
      %v1479 = vadd.f32 %v438, %v1478
      %v1480 = vpop.f32.mrb[0].mxu0
      %v1481 = vpop.f32.mrb[0].mxu0
      %v1482 = vadd.f32 %v438, %v1481
      %v1483 = vpop.f32.mrb[0].mxu0
      %1484 = vmatprep.mubr.bf16.mxu0 0
      %1485 = vmatmul.mubr.bf16.gmra.mrb[0].mxu0 %v1390
      %v1486 = vpop.f32.mrb[0].mxu0
      %v1487 = vadd.f32 %v438, %v1486
      %v1488 = vpop.f32.mrb[0].mxu0
      %v1489 = vpop.f32.mrb[0].mxu0
      %v1490 = vadd.f32 %v438, %v1489
      %v1491 = vpop.f32.mrb[0].mxu0
      %1492 = vmatprep.mubr.bf16.mxu0 0
      %1493 = vmatmul.mubr.bf16.gmra.mrb[0].mxu0 %v1393
      %v1494 = vpop.f32.mrb[0].mxu0
      %v1495 = vadd.f32 %v438, %v1494
      %v1496 = vpop.f32.mrb[0].mxu0
      %v1497 = vpop.f32.mrb[0].mxu0
      %v1498 = vadd.f32 %v438, %v1497
      %v1499 = vpop.f32.mrb[0].mxu0
      %1500 = vmatprep.mubr.bf16.mxu0 0
      %1501 = vmatmul.mubr.bf16.gmra.mrb[0].mxu0 %v1396
      %v1502 = vpop.f32.mrb[0].mxu0
      %v1503 = vadd.f32 %v438, %v1502
      %v1504 = vpop.f32.mrb[0].mxu0
      %v1505 = vpop.f32.mrb[0].mxu0
      %v1506 = vadd.f32 %v438, %v1505
      %v1507 = vpop.f32.mrb[0].mxu0
      %1508 = vmatprep.mubr.bf16.mxu0 0
      %1509 = vmatmul.mubr.bf16.gmra.mrb[0].mxu0 %v1399
      %v1510 = vpop.f32.mrb[0].mxu0
      %v1511 = vadd.f32 %v438, %v1510
      %v1512 = vpop.f32.mrb[0].mxu0
      %v1513 = vpop.f32.mrb[0].mxu0
      %v1514 = vadd.f32 %v438, %v1513
      %v1515 = vpop.f32.mrb[0].mxu0
      %1516 = vmatprep.mubr.bf16.mxu0 0
      %1517 = vmatmul.mubr.bf16.gmra.mrb[0].mxu0 %v1402
      %v1518 = vpop.f32.mrb[0].mxu0
      %v1519 = vadd.f32 %v438, %v1518
      %v1520 = vpop.f32.mrb[0].mxu0
      %v1521 = vpop.f32.mrb[0].mxu0
      %v1522 = vadd.f32 %v438, %v1521
      %v1523 = vpop.f32.mrb[0].mxu0
      %1524 = vdwg.mxu0
      %1525 = vmax.xlane.f32.xlu0 %v1463
      %v1526 = vpop.xlane.xlu0 %1525
      %1527 = vmax.xlane.f32.xlu0 %v1466
      %v1528 = vpop.xlane.xlu0 %1527
      %1529 = vmax.xlane.f32.xlu0 %v1471
      %v1530 = vpop.xlane.xlu0 %1529
      %1531 = vmax.xlane.f32.xlu0 %v1474
      %v1532 = vpop.xlane.xlu0 %1531
      %1533 = vmax.xlane.f32.xlu0 %v1479
      %v1534 = vpop.xlane.xlu0 %1533
      %1535 = vmax.xlane.f32.xlu0 %v1482
      %v1536 = vpop.xlane.xlu0 %1535
      %1537 = vmax.xlane.f32.xlu0 %v1487
      %v1538 = vpop.xlane.xlu0 %1537
      %1539 = vmax.xlane.f32.xlu0 %v1490
      %v1540 = vpop.xlane.xlu0 %1539
      %1541 = vmax.xlane.f32.xlu0 %v1495
      %v1542 = vpop.xlane.xlu0 %1541
      %1543 = vmax.xlane.f32.xlu0 %v1498
      %v1544 = vpop.xlane.xlu0 %1543
      %1545 = vmax.xlane.f32.xlu0 %v1503
      %v1546 = vpop.xlane.xlu0 %1545
      %1547 = vmax.xlane.f32.xlu0 %v1506
      %v1548 = vpop.xlane.xlu0 %1547
      %1549 = vmax.xlane.f32.xlu0 %v1511
      %v1550 = vpop.xlane.xlu0 %1549
      %1551 = vmax.xlane.f32.xlu0 %v1514
      %v1552 = vpop.xlane.xlu0 %1551
      %1553 = vmax.xlane.f32.xlu0 %v1519
      %v1554 = vpop.xlane.xlu0 %1553
      %1555 = vmax.xlane.f32.xlu0 %v1522
      %v1556 = vpop.xlane.xlu0 %1555
      %v1557 = vsub.f32 %v1463, %v1526
      %v1558 = vsub.f32 %v1466, %v1528
      %v1559 = vsub.f32 %v1471, %v1530
      %v1560 = vsub.f32 %v1474, %v1532
      %v1561 = vsub.f32 %v1479, %v1534
      %v1562 = vsub.f32 %v1482, %v1536
      %v1563 = vsub.f32 %v1487, %v1538
      %v1564 = vsub.f32 %v1490, %v1540
      %v1565 = vsub.f32 %v1495, %v1542
      %v1566 = vsub.f32 %v1498, %v1544
      %v1567 = vsub.f32 %v1503, %v1546
      %v1568 = vsub.f32 %v1506, %v1548
      %v1569 = vsub.f32 %v1511, %v1550
      %v1570 = vsub.f32 %v1514, %v1552
      %v1571 = vsub.f32 %v1519, %v1554
      %v1572 = vsub.f32 %v1522, %v1556
      %v1573 = vmul.f32 %v1557, 1.442695
      %v1574 = vpow.pop %v1573
      %v1575 = vmul.f32 %v1558, 1.442695
      %v1576 = vpow.pop %v1575
      %v1577 = vmul.f32 %v1559, 1.442695
      %v1578 = vpow.pop %v1577
      %v1579 = vmul.f32 %v1560, 1.442695
      %v1580 = vpow.pop %v1579
      %v1581 = vmul.f32 %v1561, 1.442695
      %v1582 = vpow.pop %v1581
      %v1583 = vmul.f32 %v1562, 1.442695
      %v1584 = vpow.pop %v1583
      %v1585 = vmul.f32 %v1563, 1.442695
      %v1586 = vpow.pop %v1585
      %v1587 = vmul.f32 %v1564, 1.442695
      %v1588 = vpow.pop %v1587
      %v1589 = vmul.f32 %v1565, 1.442695
      %v1590 = vpow.pop %v1589
      %v1591 = vmul.f32 %v1566, 1.442695
      %v1592 = vpow.pop %v1591
      %v1593 = vmul.f32 %v1567, 1.442695
      %v1594 = vpow.pop %v1593
      %v1595 = vmul.f32 %v1568, 1.442695
      %v1596 = vpow.pop %v1595
      %v1597 = vmul.f32 %v1569, 1.442695
      %v1598 = vpow.pop %v1597
      %v1599 = vmul.f32 %v1570, 1.442695
      %v1600 = vpow.pop %v1599
      %v1601 = vmul.f32 %v1571, 1.442695
      %v1602 = vpow.pop %v1601
      %v1603 = vmul.f32 %v1572, 1.442695
      %v1604 = vpow.pop %v1603
      %1605 = vadd.xlane.f32.xlu0 %v1574
      %v1606 = vpop.xlane.xlu0 %1605
      %1607 = vadd.xlane.f32.xlu0 %v1576
      %v1608 = vpop.xlane.xlu0 %1607
      %1609 = vadd.xlane.f32.xlu0 %v1578
      %v1610 = vpop.xlane.xlu0 %1609
      %1611 = vadd.xlane.f32.xlu0 %v1580
      %v1612 = vpop.xlane.xlu0 %1611
      %1613 = vadd.xlane.f32.xlu0 %v1582
      %v1614 = vpop.xlane.xlu0 %1613
      %1615 = vadd.xlane.f32.xlu0 %v1584
      %v1616 = vpop.xlane.xlu0 %1615
      %1617 = vadd.xlane.f32.xlu0 %v1586
      %v1618 = vpop.xlane.xlu0 %1617
      %1619 = vadd.xlane.f32.xlu0 %v1588
      %v1620 = vpop.xlane.xlu0 %1619
      %1621 = vadd.xlane.f32.xlu0 %v1590
      %v1622 = vpop.xlane.xlu0 %1621
      %1623 = vadd.xlane.f32.xlu0 %v1592
      %v1624 = vpop.xlane.xlu0 %1623
      %1625 = vadd.xlane.f32.xlu0 %v1594
      %v1626 = vpop.xlane.xlu0 %1625
      %1627 = vadd.xlane.f32.xlu0 %v1596
      %v1628 = vpop.xlane.xlu0 %1627
      %1629 = vadd.xlane.f32.xlu0 %v1598
      %v1630 = vpop.xlane.xlu0 %1629
      %1631 = vadd.xlane.f32.xlu0 %v1600
      %v1632 = vpop.xlane.xlu0 %1631
      %1633 = vadd.xlane.f32.xlu0 %v1602
      %v1634 = vpop.xlane.xlu0 %1633
      %1635 = vadd.xlane.f32.xlu0 %v1604
      %v1636 = vpop.xlane.xlu0 %1635
      %v1637 = vrcp.pop %v1606
      %v1638 = vrcp.pop %v1608
      %v1639 = vrcp.pop %v1610
      %v1640 = vrcp.pop %v1612
      %v1641 = vrcp.pop %v1614
      %v1642 = vrcp.pop %v1616
      %v1643 = vrcp.pop %v1618
      %v1644 = vrcp.pop %v1620
      %v1645 = vrcp.pop %v1622
      %v1646 = vrcp.pop %v1624
      %v1647 = vrcp.pop %v1626
      %v1648 = vrcp.pop %v1628
      %v1649 = vrcp.pop %v1630
      %v1650 = vrcp.pop %v1632
      %v1651 = vrcp.pop %v1634
      %v1652 = vrcp.pop %v1636
      %v1653 = vpack.c.bf16 %v1576, %v1574
      %v1654 = vpack.c.bf16 %v1580, %v1578
      %v1655 = vpack.c.bf16 %v1584, %v1582
      %v1656 = vpack.c.bf16 %v1588, %v1586
      %v1657 = vpack.c.bf16 %v1592, %v1590
      %v1658 = vpack.c.bf16 %v1596, %v1594
      %v1659 = vpack.c.bf16 %v1600, %v1598
      %v1660 = vpack.c.bf16 %v1604, %v1602
      %1661 = vrot.lane.b32.xlu0 %v427, 48
      %v1662 = vpop.permute.xlu0 %1661
      %1663 = vrot.lane.b32.xlu0 %v428, 48
      %v1664 = vpop.permute.xlu0 %1663
      %1665 = vrot.lane.b32.xlu0 %v429, 48
      %v1666 = vpop.permute.xlu0 %1665
      %1667 = vrot.lane.b32.xlu0 %v430, 48
      %v1668 = vpop.permute.xlu0 %1667
      %1669 = vrot.lane.b32.xlu0 %v431, 48
      %v1670 = vpop.permute.xlu0 %1669
      %1671 = vrot.lane.b32.xlu0 %v432, 48
      %v1672 = vpop.permute.xlu0 %1671
      %1673 = vrot.lane.b32.xlu0 %v433, 48
      %v1674 = vpop.permute.xlu0 %1673
      %1675 = vrot.lane.b32.xlu0 %v434, 48
      %v1676 = vpop.permute.xlu0 %1675
      %1685 = vmatprep.subr.bf16.mxu0 0
      %1686 = vmatpush1.bf16.msra.mxu0 %v1662
      %1687 = vmatprep.subr.bf16.mxu0 0
      %1688 = vmatpush1.bf16.msra.mxu0 %v1664
      %1689 = vmatprep.subr.bf16.mxu0 0
      %1690 = vmatpush1.bf16.msra.mxu0 %v1666
      %1691 = vmatprep.subr.bf16.mxu0 0
      %1692 = vmatpush1.bf16.msra.mxu0 %v1668
      %1693 = vmatprep.subr.bf16.mxu0 0
      %1694 = vmatpush1.bf16.msra.mxu0 %v1670
      %1695 = vmatprep.subr.bf16.mxu0 0
      %1696 = vmatpush1.bf16.msra.mxu0 %v1672
      %1697 = vmatprep.subr.bf16.mxu0 0
      %1698 = vmatpush1.bf16.msra.mxu0 %v1674
      %1699 = vmatprep.subr.bf16.mxu0 0
      %1700 = vmatpush1.bf16.msra.mxu0 %v1676
      %1701 = vmatprep.subr.bf16.mxu0 0
      %1702 = vmatpush1.bf16.msra.mxu0 0
      %1703 = vmatprep.subr.bf16.mxu0 0
      %1704 = vmatpush1.bf16.msra.mxu0 0
      %1705 = vmatprep.subr.bf16.mxu0 0
      %1706 = vmatpush1.bf16.msra.mxu0 0
      %1707 = vmatprep.subr.bf16.mxu0 0
      %1708 = vmatpush1.bf16.msra.mxu0 0
      %1709 = vmatprep.subr.bf16.mxu0 0
      %1710 = vmatpush1.bf16.msra.mxu0 0
      %1711 = vmatprep.subr.bf16.mxu0 0
      %1712 = vmatpush1.bf16.msra.mxu0 0
      %1713 = vmatprep.subr.bf16.mxu0 0
      %1714 = vmatpush1.bf16.msra.mxu0 0
      %1715 = vmatprep.subr.bf16.mxu0 0
      %1716 = vmatpush1.bf16.msra.mxu0 0
      %1717 = vmatprep.mubr.bf16.mxu0 0
      %1718 = vmatmul.mubr.bf16.gmra.mrb[0].mxu0 %v1653
      %v1719 = vpop.f32.mrb[0].mxu0
      %v1720 = vadd.f32 0.0, %v1719
      %v1721 = vpop.f32.mrb[0].mxu0
      %v1722 = vpop.f32.mrb[0].mxu0
      %v1723 = vadd.f32 0.0, %v1722
      %v1724 = vpop.f32.mrb[0].mxu0
      %1725 = vmatprep.mubr.bf16.mxu0 0
      %1726 = vmatmul.mubr.bf16.gmra.mrb[0].mxu0 %v1654
      %v1727 = vpop.f32.mrb[0].mxu0
      %v1728 = vadd.f32 0.0, %v1727
      %v1729 = vpop.f32.mrb[0].mxu0
      %v1730 = vpop.f32.mrb[0].mxu0
      %v1731 = vadd.f32 0.0, %v1730
      %v1732 = vpop.f32.mrb[0].mxu0
      %1733 = vmatprep.mubr.bf16.mxu0 0
      %1734 = vmatmul.mubr.bf16.gmra.mrb[0].mxu0 %v1655
      %v1735 = vpop.f32.mrb[0].mxu0
      %v1736 = vadd.f32 0.0, %v1735
      %v1737 = vpop.f32.mrb[0].mxu0
      %v1738 = vpop.f32.mrb[0].mxu0
      %v1739 = vadd.f32 0.0, %v1738
      %v1740 = vpop.f32.mrb[0].mxu0
      %1741 = vmatprep.mubr.bf16.mxu0 0
      %1742 = vmatmul.mubr.bf16.gmra.mrb[0].mxu0 %v1656
      %v1743 = vpop.f32.mrb[0].mxu0
      %v1744 = vadd.f32 0.0, %v1743
      %v1745 = vpop.f32.mrb[0].mxu0
      %v1746 = vpop.f32.mrb[0].mxu0
      %v1747 = vadd.f32 0.0, %v1746
      %v1748 = vpop.f32.mrb[0].mxu0
      %1749 = vmatprep.mubr.bf16.mxu0 0
      %1750 = vmatmul.mubr.bf16.gmra.mrb[0].mxu0 %v1657
      %v1751 = vpop.f32.mrb[0].mxu0
      %v1752 = vadd.f32 0.0, %v1751
      %v1753 = vpop.f32.mrb[0].mxu0
      %v1754 = vpop.f32.mrb[0].mxu0
      %v1755 = vadd.f32 0.0, %v1754
      %v1756 = vpop.f32.mrb[0].mxu0
      %1757 = vmatprep.mubr.bf16.mxu0 0
      %1758 = vmatmul.mubr.bf16.gmra.mrb[0].mxu0 %v1658
      %v1759 = vpop.f32.mrb[0].mxu0
      %v1760 = vadd.f32 0.0, %v1759
      %v1761 = vpop.f32.mrb[0].mxu0
      %v1762 = vpop.f32.mrb[0].mxu0
      %v1763 = vadd.f32 0.0, %v1762
      %v1764 = vpop.f32.mrb[0].mxu0
      %1765 = vmatprep.mubr.bf16.mxu0 0
      %1766 = vmatmul.mubr.bf16.gmra.mrb[0].mxu0 %v1659
      %v1767 = vpop.f32.mrb[0].mxu0
      %v1768 = vadd.f32 0.0, %v1767
      %v1769 = vpop.f32.mrb[0].mxu0
      %v1770 = vpop.f32.mrb[0].mxu0
      %v1771 = vadd.f32 0.0, %v1770
      %v1772 = vpop.f32.mrb[0].mxu0
      %1773 = vmatprep.mubr.bf16.mxu0 0
      %1774 = vmatmul.mubr.bf16.gmra.mrb[0].mxu0 %v1660
      %v1775 = vpop.f32.mrb[0].mxu0
      %v1776 = vadd.f32 0.0, %v1775
      %v1777 = vpop.f32.mrb[0].mxu0
      %v1778 = vpop.f32.mrb[0].mxu0
      %v1779 = vadd.f32 0.0, %v1778
      %v1780 = vpop.f32.mrb[0].mxu0
      %1781 = vdwg.mxu0
      %v1782 = vmul.f32 %v1720, %v1637
      %v1783 = vmul.f32 %v1723, %v1638
      %v1784 = vmul.f32 %v1728, %v1639
      %v1785 = vmul.f32 %v1731, %v1640
      %v1786 = vmul.f32 %v1736, %v1641
      %v1787 = vmul.f32 %v1739, %v1642
      %v1788 = vmul.f32 %v1744, %v1643
      %v1789 = vmul.f32 %v1747, %v1644
      %v1790 = vmul.f32 %v1752, %v1645
      %v1791 = vmul.f32 %v1755, %v1646
      %v1792 = vmul.f32 %v1760, %v1647
      %v1793 = vmul.f32 %v1763, %v1648
      %v1794 = vmul.f32 %v1768, %v1649
      %v1795 = vmul.f32 %v1771, %v1650
      %v1796 = vmul.f32 %v1776, %v1651
      %v1797 = vmul.f32 %v1779, %v1652
      %v1798 = vpack.c.bf16 %v1783, %v1782
      %v1799 = vpack.c.bf16 %v1785, %v1784
      %v1800 = vpack.c.bf16 %v1787, %v1786
      %v1801 = vpack.c.bf16 %v1789, %v1788
      %v1802 = vpack.c.bf16 %v1791, %v1790
      %v1803 = vpack.c.bf16 %v1793, %v1792
      %v1804 = vpack.c.bf16 %v1795, %v1794
      %v1805 = vpack.c.bf16 %v1797, %v1796
      %1806 = vrot.lane.b32.xlu0 %v427, 104
      %v1807 = vpop.permute.xlu0 %1806
      %1808 = vrot.lane.b32.xlu0 %v428, 104
      %v1809 = vpop.permute.xlu0 %1808
      %1810 = vrot.lane.b32.xlu0 %v429, 104
      %v1811 = vpop.permute.xlu0 %1810
      %1812 = vrot.lane.b32.xlu0 %v430, 104
      %v1813 = vpop.permute.xlu0 %1812
      %1814 = vrot.lane.b32.xlu0 %v431, 104
      %v1815 = vpop.permute.xlu0 %1814
      %1816 = vrot.lane.b32.xlu0 %v432, 104
      %v1817 = vpop.permute.xlu0 %1816
      %1818 = vrot.lane.b32.xlu0 %v433, 104
      %v1819 = vpop.permute.xlu0 %1818
      %1820 = vrot.lane.b32.xlu0 %v434, 104
      %v1821 = vpop.permute.xlu0 %1820
      %1822 = vrot.lane.b32.xlu0 %v427, 72
      %v1823 = vpop.permute.xlu0 %1822
      %1824 = vrot.lane.b32.xlu0 %v428, 72
      %v1825 = vpop.permute.xlu0 %1824
      %1826 = vrot.lane.b32.xlu0 %v429, 72
      %v1827 = vpop.permute.xlu0 %1826
      %1828 = vrot.lane.b32.xlu0 %v430, 72
      %v1829 = vpop.permute.xlu0 %1828
      %1830 = vrot.lane.b32.xlu0 %v431, 72
      %v1831 = vpop.permute.xlu0 %1830
      %1832 = vrot.lane.b32.xlu0 %v432, 72
      %v1833 = vpop.permute.xlu0 %1832
      %1834 = vrot.lane.b32.xlu0 %v433, 72
      %v1835 = vpop.permute.xlu0 %1834
      %1836 = vrot.lane.b32.xlu0 %v434, 72
      %v1837 = vpop.permute.xlu0 %1836
      %v1839 = vsel %vm463, %v1807, 0
      %v1842 = vsel %vm463, %v1809, 0
      %v1845 = vsel %vm463, %v1811, 0
      %v1848 = vsel %vm463, %v1813, 0
      %v1851 = vsel %vm463, %v1815, 0
      %v1854 = vsel %vm463, %v1817, 0
      %v1857 = vsel %vm463, %v1819, 0
      %v1860 = vsel %vm463, %v1821, 0
      %v1863 = vsel %vm463, %v1823, 0
      %v1866 = vsel %vm463, %v1825, 0
      %v1869 = vsel %vm463, %v1827, 0
      %v1872 = vsel %vm463, %v1829, 0
      %v1875 = vsel %vm463, %v1831, 0
      %v1878 = vsel %vm463, %v1833, 0
      %v1881 = vsel %vm463, %v1835, 0
      %v1884 = vsel %vm463, %v1837, 0
      %1886 = vmatprep.subr.bf16.mxu0 0
      %1887 = vmatpush1.bf16.xpose.msra.mxu0 %v1863
      %1888 = vmatprep.subr.bf16.mxu0 0
      %1889 = vmatpush1.bf16.xpose.msra.mxu0 %v1866
      %1890 = vmatprep.subr.bf16.mxu0 0
      %1891 = vmatpush1.bf16.xpose.msra.mxu0 %v1869
      %1892 = vmatprep.subr.bf16.mxu0 0
      %1893 = vmatpush1.bf16.xpose.msra.mxu0 %v1872
      %1894 = vmatprep.subr.bf16.mxu0 0
      %1895 = vmatpush1.bf16.xpose.msra.mxu0 %v1875
      %1896 = vmatprep.subr.bf16.mxu0 0
      %1897 = vmatpush1.bf16.xpose.msra.mxu0 %v1878
      %1898 = vmatprep.subr.bf16.mxu0 0
      %1899 = vmatpush1.bf16.xpose.msra.mxu0 %v1881
      %1900 = vmatprep.subr.bf16.mxu0 0
      %1901 = vmatpush1.bf16.xpose.msra.mxu0 %v1884
      %1902 = vmatprep.subr.bf16.mxu0 0
      %1903 = vmatpush1.bf16.xpose.msra.mxu0 0
      %1904 = vmatprep.subr.bf16.mxu0 0
      %1905 = vmatpush1.bf16.xpose.msra.mxu0 0
      %1906 = vmatprep.subr.bf16.mxu0 0
      %1907 = vmatpush1.bf16.xpose.msra.mxu0 0
      %1908 = vmatprep.subr.bf16.mxu0 0
      %1909 = vmatpush1.bf16.xpose.msra.mxu0 0
      %1910 = vmatprep.subr.bf16.mxu0 0
      %1911 = vmatpush1.bf16.xpose.msra.mxu0 0
      %1912 = vmatprep.subr.bf16.mxu0 0
      %1913 = vmatpush1.bf16.xpose.msra.mxu0 0
      %1914 = vmatprep.subr.bf16.mxu0 0
      %1915 = vmatpush1.bf16.xpose.msra.mxu0 0
      %1916 = vmatprep.subr.bf16.mxu0 0
      %1917 = vmatpush1.bf16.xpose.msra.mxu0 0
      %1918 = vmatprep.mubr.bf16.mxu0 0
      %1919 = vmatmul.mubr.bf16.gmra.mrb[0].mxu0 %v1839
      %v1920 = vpop.f32.mrb[0].mxu0
      %v1921 = vadd.f32 %v438, %v1920
      %v1922 = vpop.f32.mrb[0].mxu0
      %v1923 = vpop.f32.mrb[0].mxu0
      %v1924 = vadd.f32 %v438, %v1923
      %v1925 = vpop.f32.mrb[0].mxu0
      %1926 = vmatprep.mubr.bf16.mxu0 0
      %1927 = vmatmul.mubr.bf16.gmra.mrb[0].mxu0 %v1842
      %v1928 = vpop.f32.mrb[0].mxu0
      %v1929 = vadd.f32 %v438, %v1928
      %v1930 = vpop.f32.mrb[0].mxu0
      %v1931 = vpop.f32.mrb[0].mxu0
      %v1932 = vadd.f32 %v438, %v1931
      %v1933 = vpop.f32.mrb[0].mxu0
      %1934 = vmatprep.mubr.bf16.mxu0 0
      %1935 = vmatmul.mubr.bf16.gmra.mrb[0].mxu0 %v1845
      %v1936 = vpop.f32.mrb[0].mxu0
      %v1937 = vadd.f32 %v438, %v1936
      %v1938 = vpop.f32.mrb[0].mxu0
      %v1939 = vpop.f32.mrb[0].mxu0
      %v1940 = vadd.f32 %v438, %v1939
      %v1941 = vpop.f32.mrb[0].mxu0
      %1942 = vmatprep.mubr.bf16.mxu0 0
      %1943 = vmatmul.mubr.bf16.gmra.mrb[0].mxu0 %v1848
      %v1944 = vpop.f32.mrb[0].mxu0
      %v1945 = vadd.f32 %v438, %v1944
      %v1946 = vpop.f32.mrb[0].mxu0
      %v1947 = vpop.f32.mrb[0].mxu0
      %v1948 = vadd.f32 %v438, %v1947
      %v1949 = vpop.f32.mrb[0].mxu0
      %1950 = vmatprep.mubr.bf16.mxu0 0
      %1951 = vmatmul.mubr.bf16.gmra.mrb[0].mxu0 %v1851
      %v1952 = vpop.f32.mrb[0].mxu0
      %v1953 = vadd.f32 %v438, %v1952
      %v1954 = vpop.f32.mrb[0].mxu0
      %v1955 = vpop.f32.mrb[0].mxu0
      %v1956 = vadd.f32 %v438, %v1955
      %v1957 = vpop.f32.mrb[0].mxu0
      %1958 = vmatprep.mubr.bf16.mxu0 0
      %1959 = vmatmul.mubr.bf16.gmra.mrb[0].mxu0 %v1854
      %v1960 = vpop.f32.mrb[0].mxu0
      %v1961 = vadd.f32 %v438, %v1960
      %v1962 = vpop.f32.mrb[0].mxu0
      %v1963 = vpop.f32.mrb[0].mxu0
      %v1964 = vadd.f32 %v438, %v1963
      %v1965 = vpop.f32.mrb[0].mxu0
      %1966 = vmatprep.mubr.bf16.mxu0 0
      %1967 = vmatmul.mubr.bf16.gmra.mrb[0].mxu0 %v1857
      %v1968 = vpop.f32.mrb[0].mxu0
      %v1969 = vadd.f32 %v438, %v1968
      %v1970 = vpop.f32.mrb[0].mxu0
      %v1971 = vpop.f32.mrb[0].mxu0
      %v1972 = vadd.f32 %v438, %v1971
      %v1973 = vpop.f32.mrb[0].mxu0
      %1974 = vmatprep.mubr.bf16.mxu0 0
      %1975 = vmatmul.mubr.bf16.gmra.mrb[0].mxu0 %v1860
      %v1976 = vpop.f32.mrb[0].mxu0
      %v1977 = vadd.f32 %v438, %v1976
      %v1978 = vpop.f32.mrb[0].mxu0
      %v1979 = vpop.f32.mrb[0].mxu0
      %v1980 = vadd.f32 %v438, %v1979
      %v1981 = vpop.f32.mrb[0].mxu0
      %1982 = vdwg.mxu0
      %1983 = vmax.xlane.f32.xlu0 %v1921
      %v1984 = vpop.xlane.xlu0 %1983
      %1985 = vmax.xlane.f32.xlu0 %v1924
      %v1986 = vpop.xlane.xlu0 %1985
      %1987 = vmax.xlane.f32.xlu0 %v1929
      %v1988 = vpop.xlane.xlu0 %1987
      %1989 = vmax.xlane.f32.xlu0 %v1932
      %v1990 = vpop.xlane.xlu0 %1989
      %1991 = vmax.xlane.f32.xlu0 %v1937
      %v1992 = vpop.xlane.xlu0 %1991
      %1993 = vmax.xlane.f32.xlu0 %v1940
      %v1994 = vpop.xlane.xlu0 %1993
      %1995 = vmax.xlane.f32.xlu0 %v1945
      %v1996 = vpop.xlane.xlu0 %1995
      %1997 = vmax.xlane.f32.xlu0 %v1948
      %v1998 = vpop.xlane.xlu0 %1997
      %1999 = vmax.xlane.f32.xlu0 %v1953
      %v2000 = vpop.xlane.xlu0 %1999
      %2001 = vmax.xlane.f32.xlu0 %v1956
      %v2002 = vpop.xlane.xlu0 %2001
      %2003 = vmax.xlane.f32.xlu0 %v1961
      %v2004 = vpop.xlane.xlu0 %2003
      %2005 = vmax.xlane.f32.xlu0 %v1964
      %v2006 = vpop.xlane.xlu0 %2005
      %2007 = vmax.xlane.f32.xlu0 %v1969
      %v2008 = vpop.xlane.xlu0 %2007
      %2009 = vmax.xlane.f32.xlu0 %v1972
      %v2010 = vpop.xlane.xlu0 %2009
      %2011 = vmax.xlane.f32.xlu0 %v1977
      %v2012 = vpop.xlane.xlu0 %2011
      %2013 = vmax.xlane.f32.xlu0 %v1980
      %v2014 = vpop.xlane.xlu0 %2013
      %v2015 = vsub.f32 %v1921, %v1984
      %v2016 = vsub.f32 %v1924, %v1986
      %v2017 = vsub.f32 %v1929, %v1988
      %v2018 = vsub.f32 %v1932, %v1990
      %v2019 = vsub.f32 %v1937, %v1992
      %v2020 = vsub.f32 %v1940, %v1994
      %v2021 = vsub.f32 %v1945, %v1996
      %v2022 = vsub.f32 %v1948, %v1998
      %v2023 = vsub.f32 %v1953, %v2000
      %v2024 = vsub.f32 %v1956, %v2002
      %v2025 = vsub.f32 %v1961, %v2004
      %v2026 = vsub.f32 %v1964, %v2006
      %v2027 = vsub.f32 %v1969, %v2008
      %v2028 = vsub.f32 %v1972, %v2010
      %v2029 = vsub.f32 %v1977, %v2012
      %v2030 = vsub.f32 %v1980, %v2014
      %v2031 = vmul.f32 %v2015, 1.442695
      %v2032 = vpow.pop %v2031
      %v2033 = vmul.f32 %v2016, 1.442695
      %v2034 = vpow.pop %v2033
      %v2035 = vmul.f32 %v2017, 1.442695
      %v2036 = vpow.pop %v2035
      %v2037 = vmul.f32 %v2018, 1.442695
      %v2038 = vpow.pop %v2037
      %v2039 = vmul.f32 %v2019, 1.442695
      %v2040 = vpow.pop %v2039
      %v2041 = vmul.f32 %v2020, 1.442695
      %v2042 = vpow.pop %v2041
      %v2043 = vmul.f32 %v2021, 1.442695
      %v2044 = vpow.pop %v2043
      %v2045 = vmul.f32 %v2022, 1.442695
      %v2046 = vpow.pop %v2045
      %v2047 = vmul.f32 %v2023, 1.442695
      %v2048 = vpow.pop %v2047
      %v2049 = vmul.f32 %v2024, 1.442695
      %v2050 = vpow.pop %v2049
      %v2051 = vmul.f32 %v2025, 1.442695
      %v2052 = vpow.pop %v2051
      %v2053 = vmul.f32 %v2026, 1.442695
      %v2054 = vpow.pop %v2053
      %v2055 = vmul.f32 %v2027, 1.442695
      %v2056 = vpow.pop %v2055
      %v2057 = vmul.f32 %v2028, 1.442695
      %v2058 = vpow.pop %v2057
      %v2059 = vmul.f32 %v2029, 1.442695
      %v2060 = vpow.pop %v2059
      %v2061 = vmul.f32 %v2030, 1.442695
      %v2062 = vpow.pop %v2061
      %2063 = vadd.xlane.f32.xlu0 %v2032
      %v2064 = vpop.xlane.xlu0 %2063
      %2065 = vadd.xlane.f32.xlu0 %v2034
      %v2066 = vpop.xlane.xlu0 %2065
      %2067 = vadd.xlane.f32.xlu0 %v2036
      %v2068 = vpop.xlane.xlu0 %2067
      %2069 = vadd.xlane.f32.xlu0 %v2038
      %v2070 = vpop.xlane.xlu0 %2069
      %2071 = vadd.xlane.f32.xlu0 %v2040
      %v2072 = vpop.xlane.xlu0 %2071
      %2073 = vadd.xlane.f32.xlu0 %v2042
      %v2074 = vpop.xlane.xlu0 %2073
      %2075 = vadd.xlane.f32.xlu0 %v2044
      %v2076 = vpop.xlane.xlu0 %2075
      %2077 = vadd.xlane.f32.xlu0 %v2046
      %v2078 = vpop.xlane.xlu0 %2077
      %2079 = vadd.xlane.f32.xlu0 %v2048
      %v2080 = vpop.xlane.xlu0 %2079
      %2081 = vadd.xlane.f32.xlu0 %v2050
      %v2082 = vpop.xlane.xlu0 %2081
      %2083 = vadd.xlane.f32.xlu0 %v2052
      %v2084 = vpop.xlane.xlu0 %2083
      %2085 = vadd.xlane.f32.xlu0 %v2054
      %v2086 = vpop.xlane.xlu0 %2085
      %2087 = vadd.xlane.f32.xlu0 %v2056
      %v2088 = vpop.xlane.xlu0 %2087
      %2089 = vadd.xlane.f32.xlu0 %v2058
      %v2090 = vpop.xlane.xlu0 %2089
      %2091 = vadd.xlane.f32.xlu0 %v2060
      %v2092 = vpop.xlane.xlu0 %2091
      %2093 = vadd.xlane.f32.xlu0 %v2062
      %v2094 = vpop.xlane.xlu0 %2093
      %v2095 = vrcp.pop %v2064
      %v2096 = vrcp.pop %v2066
      %v2097 = vrcp.pop %v2068
      %v2098 = vrcp.pop %v2070
      %v2099 = vrcp.pop %v2072
      %v2100 = vrcp.pop %v2074
      %v2101 = vrcp.pop %v2076
      %v2102 = vrcp.pop %v2078
      %v2103 = vrcp.pop %v2080
      %v2104 = vrcp.pop %v2082
      %v2105 = vrcp.pop %v2084
      %v2106 = vrcp.pop %v2086
      %v2107 = vrcp.pop %v2088
      %v2108 = vrcp.pop %v2090
      %v2109 = vrcp.pop %v2092
      %v2110 = vrcp.pop %v2094
      %v2111 = vpack.c.bf16 %v2034, %v2032
      %v2112 = vpack.c.bf16 %v2038, %v2036
      %v2113 = vpack.c.bf16 %v2042, %v2040
      %v2114 = vpack.c.bf16 %v2046, %v2044
      %v2115 = vpack.c.bf16 %v2050, %v2048
      %v2116 = vpack.c.bf16 %v2054, %v2052
      %v2117 = vpack.c.bf16 %v2058, %v2056
      %v2118 = vpack.c.bf16 %v2062, %v2060
      %2119 = vrot.lane.b32.xlu0 %v427, 40
      %v2120 = vpop.permute.xlu0 %2119
      %2121 = vrot.lane.b32.xlu0 %v428, 40
      %v2122 = vpop.permute.xlu0 %2121
      %2123 = vrot.lane.b32.xlu0 %v429, 40
      %v2124 = vpop.permute.xlu0 %2123
      %2125 = vrot.lane.b32.xlu0 %v430, 40
      %v2126 = vpop.permute.xlu0 %2125
      %2127 = vrot.lane.b32.xlu0 %v431, 40
      %v2128 = vpop.permute.xlu0 %2127
      %2129 = vrot.lane.b32.xlu0 %v432, 40
      %v2130 = vpop.permute.xlu0 %2129
      %2131 = vrot.lane.b32.xlu0 %v433, 40
      %v2132 = vpop.permute.xlu0 %2131
      %2133 = vrot.lane.b32.xlu0 %v434, 40
      %v2134 = vpop.permute.xlu0 %2133
      %2143 = vmatprep.subr.bf16.mxu0 0
      %2144 = vmatpush1.bf16.msra.mxu0 %v2120
      %2145 = vmatprep.subr.bf16.mxu0 0
      %2146 = vmatpush1.bf16.msra.mxu0 %v2122
      %2147 = vmatprep.subr.bf16.mxu0 0
      %2148 = vmatpush1.bf16.msra.mxu0 %v2124
      %2149 = vmatprep.subr.bf16.mxu0 0
      %2150 = vmatpush1.bf16.msra.mxu0 %v2126
      %2151 = vmatprep.subr.bf16.mxu0 0
      %2152 = vmatpush1.bf16.msra.mxu0 %v2128
      %2153 = vmatprep.subr.bf16.mxu0 0
      %2154 = vmatpush1.bf16.msra.mxu0 %v2130
      %2155 = vmatprep.subr.bf16.mxu0 0
      %2156 = vmatpush1.bf16.msra.mxu0 %v2132
      %2157 = vmatprep.subr.bf16.mxu0 0
      %2158 = vmatpush1.bf16.msra.mxu0 %v2134
      %2159 = vmatprep.subr.bf16.mxu0 0
      %2160 = vmatpush1.bf16.msra.mxu0 0
      %2161 = vmatprep.subr.bf16.mxu0 0
      %2162 = vmatpush1.bf16.msra.mxu0 0
      %2163 = vmatprep.subr.bf16.mxu0 0
      %2164 = vmatpush1.bf16.msra.mxu0 0
      %2165 = vmatprep.subr.bf16.mxu0 0
      %2166 = vmatpush1.bf16.msra.mxu0 0
      %2167 = vmatprep.subr.bf16.mxu0 0
      %2168 = vmatpush1.bf16.msra.mxu0 0
      %2169 = vmatprep.subr.bf16.mxu0 0
      %2170 = vmatpush1.bf16.msra.mxu0 0
      %2171 = vmatprep.subr.bf16.mxu0 0
      %2172 = vmatpush1.bf16.msra.mxu0 0
      %2173 = vmatprep.subr.bf16.mxu0 0
      %2174 = vmatpush1.bf16.msra.mxu0 0
      %2175 = vmatprep.mubr.bf16.mxu0 0
      %2176 = vmatmul.mubr.bf16.gmra.mrb[0].mxu0 %v2111
      %v2177 = vpop.f32.mrb[0].mxu0
      %v2178 = vadd.f32 0.0, %v2177
      %v2179 = vpop.f32.mrb[0].mxu0
      %v2180 = vpop.f32.mrb[0].mxu0
      %v2181 = vadd.f32 0.0, %v2180
      %v2182 = vpop.f32.mrb[0].mxu0
      %2183 = vmatprep.mubr.bf16.mxu0 0
      %2184 = vmatmul.mubr.bf16.gmra.mrb[0].mxu0 %v2112
      %v2185 = vpop.f32.mrb[0].mxu0
      %v2186 = vadd.f32 0.0, %v2185
      %v2187 = vpop.f32.mrb[0].mxu0
      %v2188 = vpop.f32.mrb[0].mxu0
      %v2189 = vadd.f32 0.0, %v2188
      %v2190 = vpop.f32.mrb[0].mxu0
      %2191 = vmatprep.mubr.bf16.mxu0 0
      %2192 = vmatmul.mubr.bf16.gmra.mrb[0].mxu0 %v2113
      %v2193 = vpop.f32.mrb[0].mxu0
      %v2194 = vadd.f32 0.0, %v2193
      %v2195 = vpop.f32.mrb[0].mxu0
      %v2196 = vpop.f32.mrb[0].mxu0
      %v2197 = vadd.f32 0.0, %v2196
      %v2198 = vpop.f32.mrb[0].mxu0
      %2199 = vmatprep.mubr.bf16.mxu0 0
      %2200 = vmatmul.mubr.bf16.gmra.mrb[0].mxu0 %v2114
      %v2201 = vpop.f32.mrb[0].mxu0
      %v2202 = vadd.f32 0.0, %v2201
      %v2203 = vpop.f32.mrb[0].mxu0
      %v2204 = vpop.f32.mrb[0].mxu0
      %v2205 = vadd.f32 0.0, %v2204
      %v2206 = vpop.f32.mrb[0].mxu0
      %2207 = vmatprep.mubr.bf16.mxu0 0
      %2208 = vmatmul.mubr.bf16.gmra.mrb[0].mxu0 %v2115
      %v2209 = vpop.f32.mrb[0].mxu0
      %v2210 = vadd.f32 0.0, %v2209
      %v2211 = vpop.f32.mrb[0].mxu0
      %v2212 = vpop.f32.mrb[0].mxu0
      %v2213 = vadd.f32 0.0, %v2212
      %v2214 = vpop.f32.mrb[0].mxu0
      %2215 = vmatprep.mubr.bf16.mxu0 0
      %2216 = vmatmul.mubr.bf16.gmra.mrb[0].mxu0 %v2116
      %v2217 = vpop.f32.mrb[0].mxu0
      %v2218 = vadd.f32 0.0, %v2217
      %v2219 = vpop.f32.mrb[0].mxu0
      %v2220 = vpop.f32.mrb[0].mxu0
      %v2221 = vadd.f32 0.0, %v2220
      %v2222 = vpop.f32.mrb[0].mxu0
      %2223 = vmatprep.mubr.bf16.mxu0 0
      %2224 = vmatmul.mubr.bf16.gmra.mrb[0].mxu0 %v2117
      %v2225 = vpop.f32.mrb[0].mxu0
      %v2226 = vadd.f32 0.0, %v2225
      %v2227 = vpop.f32.mrb[0].mxu0
      %v2228 = vpop.f32.mrb[0].mxu0
      %v2229 = vadd.f32 0.0, %v2228
      %v2230 = vpop.f32.mrb[0].mxu0
      %2231 = vmatprep.mubr.bf16.mxu0 0
      %2232 = vmatmul.mubr.bf16.gmra.mrb[0].mxu0 %v2118
      %v2233 = vpop.f32.mrb[0].mxu0
      %v2234 = vadd.f32 0.0, %v2233
      %v2235 = vpop.f32.mrb[0].mxu0
      %v2236 = vpop.f32.mrb[0].mxu0
      %v2237 = vadd.f32 0.0, %v2236
      %v2238 = vpop.f32.mrb[0].mxu0
      %2239 = vdwg.mxu0
      %v2240 = vmul.f32 %v2178, %v2095
      %v2241 = vmul.f32 %v2181, %v2096
      %v2242 = vmul.f32 %v2186, %v2097
      %v2243 = vmul.f32 %v2189, %v2098
      %v2244 = vmul.f32 %v2194, %v2099
      %v2245 = vmul.f32 %v2197, %v2100
      %v2246 = vmul.f32 %v2202, %v2101
      %v2247 = vmul.f32 %v2205, %v2102
      %v2248 = vmul.f32 %v2210, %v2103
      %v2249 = vmul.f32 %v2213, %v2104
      %v2250 = vmul.f32 %v2218, %v2105
      %v2251 = vmul.f32 %v2221, %v2106
      %v2252 = vmul.f32 %v2226, %v2107
      %v2253 = vmul.f32 %v2229, %v2108
      %v2254 = vmul.f32 %v2234, %v2109
      %v2255 = vmul.f32 %v2237, %v2110
      %v2256 = vpack.c.bf16 %v2241, %v2240
      %v2257 = vpack.c.bf16 %v2243, %v2242
      %v2258 = vpack.c.bf16 %v2245, %v2244
      %v2259 = vpack.c.bf16 %v2247, %v2246
      %v2260 = vpack.c.bf16 %v2249, %v2248
      %v2261 = vpack.c.bf16 %v2251, %v2250
      %v2262 = vpack.c.bf16 %v2253, %v2252
      %v2263 = vpack.c.bf16 %v2255, %v2254
      %2272 = vrot.lane.b32.xlu0 %v1340, 8
      %v2273 = vpop.permute.xlu0 %2272
      %2274 = vrot.lane.b32.xlu0 %v1341, 8
      %v2275 = vpop.permute.xlu0 %2274
      %2276 = vrot.lane.b32.xlu0 %v1342, 8
      %v2277 = vpop.permute.xlu0 %2276
      %2278 = vrot.lane.b32.xlu0 %v1343, 8
      %v2279 = vpop.permute.xlu0 %2278
      %2280 = vrot.lane.b32.xlu0 %v1344, 8
      %v2281 = vpop.permute.xlu0 %2280
      %2282 = vrot.lane.b32.xlu0 %v1345, 8
      %v2283 = vpop.permute.xlu0 %2282
      %2284 = vrot.lane.b32.xlu0 %v1346, 8
      %v2285 = vpop.permute.xlu0 %2284
      %2286 = vrot.lane.b32.xlu0 %v1347, 8
      %v2287 = vpop.permute.xlu0 %2286
      %2296 = vrot.lane.b32.xlu0 %v1798, 16
      %v2297 = vpop.permute.xlu0 %2296
      %2298 = vrot.lane.b32.xlu0 %v1799, 16
      %v2299 = vpop.permute.xlu0 %2298
      %2300 = vrot.lane.b32.xlu0 %v1800, 16
      %v2301 = vpop.permute.xlu0 %2300
      %2302 = vrot.lane.b32.xlu0 %v1801, 16
      %v2303 = vpop.permute.xlu0 %2302
      %2304 = vrot.lane.b32.xlu0 %v1802, 16
      %v2305 = vpop.permute.xlu0 %2304
      %2306 = vrot.lane.b32.xlu0 %v1803, 16
      %v2307 = vpop.permute.xlu0 %2306
      %2308 = vrot.lane.b32.xlu0 %v1804, 16
      %v2309 = vpop.permute.xlu0 %2308
      %2310 = vrot.lane.b32.xlu0 %v1805, 16
      %v2311 = vpop.permute.xlu0 %2310
      %2320 = vrot.lane.b32.xlu0 %v2256, 24
      %v2321 = vpop.permute.xlu0 %2320
      %2322 = vrot.lane.b32.xlu0 %v2257, 24
      %v2323 = vpop.permute.xlu0 %2322
      %2324 = vrot.lane.b32.xlu0 %v2258, 24
      %v2325 = vpop.permute.xlu0 %2324
      %2326 = vrot.lane.b32.xlu0 %v2259, 24
      %v2327 = vpop.permute.xlu0 %2326
      %2328 = vrot.lane.b32.xlu0 %v2260, 24
      %v2329 = vpop.permute.xlu0 %2328
      %2330 = vrot.lane.b32.xlu0 %v2261, 24
      %v2331 = vpop.permute.xlu0 %2330
      %2332 = vrot.lane.b32.xlu0 %v2262, 24
      %v2333 = vpop.permute.xlu0 %2332
      %2334 = vrot.lane.b32.xlu0 %v2263, 24
      %v2335 = vpop.permute.xlu0 %2334
      %v2338 = vsel %vm463, %v882, %v2273
      %v2341 = vsel %vm463, %v883, %v2275
      %v2344 = vsel %vm463, %v884, %v2277
      %v2347 = vsel %vm463, %v885, %v2279
      %v2350 = vsel %vm463, %v886, %v2281
      %v2353 = vsel %vm463, %v887, %v2283
      %v2356 = vsel %vm463, %v888, %v2285
      %v2359 = vsel %vm463, %v889, %v2287
      %vm2360 = vcmask 130048
      %v2362 = vsel %vm2360, %v2338, %v2297
      %v2364 = vsel %vm2360, %v2341, %v2299
      %v2366 = vsel %vm2360, %v2344, %v2301
      %v2368 = vsel %vm2360, %v2347, %v2303
      %v2370 = vsel %vm2360, %v2350, %v2305
      %v2372 = vsel %vm2360, %v2353, %v2307
      %v2374 = vsel %vm2360, %v2356, %v2309
      %v2376 = vsel %vm2360, %v2359, %v2311
      %vm2377 = vcmask 195584
      %v2379 = vsel %vm2377, %v2362, %v2321
      %v2382 = vsel %vm2377, %v2364, %v2323
      %v2385 = vsel %vm2377, %v2366, %v2325
      %v2388 = vsel %vm2377, %v2368, %v2327
      %v2391 = vsel %vm2377, %v2370, %v2329
      %v2394 = vsel %vm2377, %v2372, %v2331
      %v2397 = vsel %vm2377, %v2374, %v2333
      %v2400 = vsel %vm2377, %v2376, %v2335
      %2402 = vst.msk [vmem:[#allocation2] sm:$0xff] %vm305, %v2379
      %2403 = vst.msk [vmem:[#allocation2 + $0x8] sm:$0xff] %vm305, %v2382
      %2404 = vst.msk [vmem:[#allocation2 + $0x10] sm:$0xff] %vm305, %v2385
      %2405 = vst.msk [vmem:[#allocation2 + $0x18] sm:$0xff] %vm305, %v2388
      %2406 = vst.msk [vmem:[#allocation2 + $0x20] sm:$0xff] %vm305, %v2391
      %2407 = vst.msk [vmem:[#allocation2 + $0x28] sm:$0xff] %vm305, %v2394
      %2408 = vst.msk [vmem:[#allocation2 + $0x30] sm:$0xff] %vm305, %v2397
      %2409 = vst.msk [vmem:[#allocation2 + $0x38] sm:$0xff] %vm305, %v2400
      %v2410 = vld [vmem:[#allocation2] sm:$0xff]
      %v2411 = vld [vmem:[#allocation2 + $0x8] sm:$0xff]
      %v2412 = vld [vmem:[#allocation2 + $0x10] sm:$0xff]
      %v2413 = vld [vmem:[#allocation2 + $0x18] sm:$0xff]
      %v2414 = vld [vmem:[#allocation2 + $0x20] sm:$0xff]
      %v2415 = vld [vmem:[#allocation2 + $0x28] sm:$0xff]
      %v2416 = vld [vmem:[#allocation2 + $0x30] sm:$0xff]
      %v2417 = vld [vmem:[#allocation2 + $0x38] sm:$0xff]
      %v2418 = vld [vmem:[%s3] sm:$0xf]
      %v2419 = vld [vmem:[%s3 + $0x4] sm:$0xf]
      %v2420 = vld [vmem:[%s3 + $0x8] sm:$0xf]
      %v2421 = vld [vmem:[%s3 + $0xc] sm:$0xf]
      %v2422 = vld [vmem:[%s4] sm:$0x1]
      %v2424 = vlaneseq
      %v2425 = vshrl.u32 %v2424, 7
      %v2426 = vsub.s32 0, %v2425
      %v2427 = vrot.slane %v2422, %v2426
      %v2433 = vunpack.c.l.b16 %v2418
      %v2434 = vunpack.c.l.b16 %v2419
      %v2435 = vunpack.c.l.b16 %v2420
      %v2436 = vunpack.c.l.b16 %v2421
      %v2437 = vpack.c.b16 %v2434, %v2433
      %v2438 = vpack.c.b16 %v2436, %v2435
      %v2442 = vsel %vm305, %v2410, 0
      %v2445 = vsel %vm305, %v2411, 0
      %v2448 = vsel %vm305, %v2412, 0
      %v2451 = vsel %vm305, %v2413, 0
      %v2454 = vsel %vm305, %v2414, 0
      %v2457 = vsel %vm305, %v2415, 0
      %v2460 = vsel %vm305, %v2416, 0
      %v2463 = vsel %vm305, %v2417, 0
      %2465 = vmatprep.subr.bf16.mxu0 0
      %2466 = vmatpush1.bf16.msra.mxu0 %v2437
      %2467 = vmatprep.subr.bf16.mxu0 0
      %2468 = vmatpush1.bf16.msra.mxu0 %v2438
      %2469 = vmatprep.subr.bf16.mxu0 0
      %2470 = vmatpush1.bf16.msra.mxu0 0
      %2471 = vmatprep.subr.bf16.mxu0 0
      %2472 = vmatpush1.bf16.msra.mxu0 0
      %2473 = vmatprep.subr.bf16.mxu0 0
      %2474 = vmatpush1.bf16.msra.mxu0 0
      %2475 = vmatprep.subr.bf16.mxu0 0
      %2476 = vmatpush1.bf16.msra.mxu0 0
      %2477 = vmatprep.subr.bf16.mxu0 0
      %2478 = vmatpush1.bf16.msra.mxu0 0
      %2479 = vmatprep.subr.bf16.mxu0 0
      %2480 = vmatpush1.bf16.msra.mxu0 0
      %2481 = vmatprep.subr.bf16.mxu0 0
      %2482 = vmatpush1.bf16.msra.mxu0 0
      %2483 = vmatprep.subr.bf16.mxu0 0
      %2484 = vmatpush1.bf16.msra.mxu0 0
      %2485 = vmatprep.subr.bf16.mxu0 0
      %2486 = vmatpush1.bf16.msra.mxu0 0
      %2487 = vmatprep.subr.bf16.mxu0 0
      %2488 = vmatpush1.bf16.msra.mxu0 0
      %2489 = vmatprep.subr.bf16.mxu0 0
      %2490 = vmatpush1.bf16.msra.mxu0 0
      %2491 = vmatprep.subr.bf16.mxu0 0
      %2492 = vmatpush1.bf16.msra.mxu0 0
      %2493 = vmatprep.subr.bf16.mxu0 0
      %2494 = vmatpush1.bf16.msra.mxu0 0
      %2495 = vmatprep.subr.bf16.mxu0 0
      %2496 = vmatpush1.bf16.msra.mxu0 0
      %2497 = vmatprep.mubr.bf16.mxu0 0
      %2498 = vmatmul.mubr.bf16.gmra.mrb[0].mxu0 %v2442
      %v2499 = vpop.f32.mrb[0].mxu0
      %v2500 = vadd.f32 %v2427, %v2499
      %v2501 = vpop.f32.mrb[0].mxu0
      %v2502 = vpop.f32.mrb[0].mxu0
      %v2503 = vadd.f32 %v2427, %v2502
      %v2504 = vpop.f32.mrb[0].mxu0
      %2505 = vmatprep.mubr.bf16.mxu0 0
      %2506 = vmatmul.mubr.bf16.gmra.mrb[0].mxu0 %v2445
      %v2507 = vpop.f32.mrb[0].mxu0
      %v2508 = vadd.f32 %v2427, %v2507
      %v2509 = vpop.f32.mrb[0].mxu0
      %v2510 = vpop.f32.mrb[0].mxu0
      %v2511 = vadd.f32 %v2427, %v2510
      %v2512 = vpop.f32.mrb[0].mxu0
      %2513 = vmatprep.mubr.bf16.mxu0 0
      %2514 = vmatmul.mubr.bf16.gmra.mrb[0].mxu0 %v2448
      %v2515 = vpop.f32.mrb[0].mxu0
      %v2516 = vadd.f32 %v2427, %v2515
      %v2517 = vpop.f32.mrb[0].mxu0
      %v2518 = vpop.f32.mrb[0].mxu0
      %v2519 = vadd.f32 %v2427, %v2518
      %v2520 = vpop.f32.mrb[0].mxu0
      %2521 = vmatprep.mubr.bf16.mxu0 0
      %2522 = vmatmul.mubr.bf16.gmra.mrb[0].mxu0 %v2451
      %v2523 = vpop.f32.mrb[0].mxu0
      %v2524 = vadd.f32 %v2427, %v2523
      %v2525 = vpop.f32.mrb[0].mxu0
      %v2526 = vpop.f32.mrb[0].mxu0
      %v2527 = vadd.f32 %v2427, %v2526
      %v2528 = vpop.f32.mrb[0].mxu0
      %2529 = vmatprep.mubr.bf16.mxu0 0
      %2530 = vmatmul.mubr.bf16.gmra.mrb[0].mxu0 %v2454
      %v2531 = vpop.f32.mrb[0].mxu0
      %v2532 = vadd.f32 %v2427, %v2531
      %v2533 = vpop.f32.mrb[0].mxu0
      %v2534 = vpop.f32.mrb[0].mxu0
      %v2535 = vadd.f32 %v2427, %v2534
      %v2536 = vpop.f32.mrb[0].mxu0
      %2537 = vmatprep.mubr.bf16.mxu0 0
      %2538 = vmatmul.mubr.bf16.gmra.mrb[0].mxu0 %v2457
      %v2539 = vpop.f32.mrb[0].mxu0
      %v2540 = vadd.f32 %v2427, %v2539
      %v2541 = vpop.f32.mrb[0].mxu0
      %v2542 = vpop.f32.mrb[0].mxu0
      %v2543 = vadd.f32 %v2427, %v2542
      %v2544 = vpop.f32.mrb[0].mxu0
      %2545 = vmatprep.mubr.bf16.mxu0 0
      %2546 = vmatmul.mubr.bf16.gmra.mrb[0].mxu0 %v2460
      %v2547 = vpop.f32.mrb[0].mxu0
      %v2548 = vadd.f32 %v2427, %v2547
      %v2549 = vpop.f32.mrb[0].mxu0
      %v2550 = vpop.f32.mrb[0].mxu0
      %v2551 = vadd.f32 %v2427, %v2550
      %v2552 = vpop.f32.mrb[0].mxu0
      %2553 = vmatprep.mubr.bf16.mxu0 0
      %2554 = vmatmul.mubr.bf16.gmra.mrb[0].mxu0 %v2463
      %v2555 = vpop.f32.mrb[0].mxu0
      %v2556 = vadd.f32 %v2427, %v2555
      %v2557 = vpop.f32.mrb[0].mxu0
      %v2558 = vpop.f32.mrb[0].mxu0
      %v2559 = vadd.f32 %v2427, %v2558
      %v2560 = vpop.f32.mrb[0].mxu0
      %2561 = vdwg.mxu0
      %2562 = vst.msk [vmem:[%s224] sm:$0xff] %vm305, %v2500
      %2563 = vst.msk [vmem:[%s224 + $0x8] sm:$0xff] %vm305, %v2503
      %2564 = vst.msk [vmem:[%s224 + $0x10] sm:$0xff] %vm305, %v2508
      %2565 = vst.msk [vmem:[%s224 + $0x18] sm:$0xff] %vm305, %v2511
      %2566 = vst.msk [vmem:[%s224 + $0x20] sm:$0xff] %vm305, %v2516
      %2567 = vst.msk [vmem:[%s224 + $0x28] sm:$0xff] %vm305, %v2519
      %2568 = vst.msk [vmem:[%s224 + $0x30] sm:$0xff] %vm305, %v2524
      %2569 = vst.msk [vmem:[%s224 + $0x38] sm:$0xff] %vm305, %v2527
      %2570 = vst.msk [vmem:[%s224 + $0x40] sm:$0xff] %vm305, %v2532
      %2571 = vst.msk [vmem:[%s224 + $0x48] sm:$0xff] %vm305, %v2535
      %2572 = vst.msk [vmem:[%s224 + $0x50] sm:$0xff] %vm305, %v2540
      %2573 = vst.msk [vmem:[%s224 + $0x58] sm:$0xff] %vm305, %v2543
      %2574 = vst.msk [vmem:[%s224 + $0x60] sm:$0xff] %vm305, %v2548
      %2575 = vst.msk [vmem:[%s224 + $0x68] sm:$0xff] %vm305, %v2551
      %2576 = vst.msk [vmem:[%s224 + $0x70] sm:$0xff] %vm305, %v2556
      %2577 = vst.msk [vmem:[%s224 + $0x78] sm:$0xff] %vm305, %v2559
      %p2578 = scmp.lt.s32.totalorder %s16, 1
      %s2579 = scalar_select %p2578, %s16, 1
      %s2580 = smul.addr %s2579, 16
      %s2581 = smul.addr %s2580, 8
      %s2582 = scalar_lea.vmem %s5, %s2581
      // Predicated region
      $region41: #{tpu_custom_call.1} parent=39 // pred_check
        %p2583 = pneg %p144
      $region42: #{tpu_custom_call.1} parent=39 // pred_check_branch
        %2585 = sbr.rel (%p2583) target = $region44
      $region43: #{tpu_custom_call.1} parent=39 // pred_region
        _
      $region44: #{tpu_custom_call.1} parent=39 // pred_fallthru
        _
    $region40: #{tpu_custom_call.1} parent=5 // pred_fallthru
      _
    %p2586 = scmp.le.s32.totalorder 2, %s11
    // Predicated region
    $region45: #{tpu_custom_call.1} parent=5 // pred_check
      %p2587 = pneg %p2586
    $region46: #{tpu_custom_call.1} parent=5 // pred_check_branch
      %2589 = sbr.rel (%p2587) target = $region48
    $region47: #{tpu_custom_call.1} parent=5 // pred_region
      %s2590 = ssub.s32 %s11, 2
      // Predicated region
      $region49: #{tpu_custom_call.1} parent=47 // pred_check
        %p2591 = pneg %p150
      $region50: #{tpu_custom_call.1} parent=47 // pred_check_branch
        %2593 = sbr.rel (%p2591) target = $region52
      $region51: #{tpu_custom_call.1} parent=47 // pred_region
        %p2594 = scmp.lt.s32.totalorder %s17, 1
        %s2595 = scalar_select %p2594, %s17, 1
        %s2596 = smul.addr %s2595, 16
        %s2597 = smul.addr %s2596, 8
        %s2598 = scalar_lea.vmem %s5, %s2597
      $region52: #{tpu_custom_call.1} parent=47 // pred_fallthru
        _
    $region48: #{tpu_custom_call.1} parent=5 // pred_fallthru
      _
  $region6: #{tpu_custom_call.1} parent=0 // loop_footer
    %s15 = sadd.s32 1, %s11
  $region7: #{tpu_custom_call.1} parent=0 // loop_footer_branch
    %10 = sbr.rel target = $region3
  $region8: #{tpu_custom_call.1} parent=0 // loop_exit
    _

</llo_original>
